<compile_context>
chip_gen: v5e
topology: v5e:2x2
jax: 0.10.0
libtpu: 0.0.40
codegen_flags: <defaults>
</compile_context>

<pallas_src>
import jax
import jax.numpy as jnp
from jax.experimental import pallas as pl
from jax.experimental.pallas import tpu as pltpu

B = 2            # batch
N = 8            # nodes per graph (sequence length)
D = 32           # embed_dim
L = 4            # num GearNet layers
V = 16           # vocab size
PAD = 0          # padding_idx
RADIUS = 6.0     # radius_graph r
BN = B * N       # total nodes (batch folded)
BE = B * N * N   # total dense, ordered node pairs (batch folded)


# ----------------------------- Pallas kernel --------------------------------
def gearnet_kernel(x_ref, coord_ref, valid_ref, wmat_ref, wvec_ref, out_ref):
    x = x_ref[...]                      # (BN, D) token embeddings
    valid = valid_ref[...]              # (B, N)  1.0 = real node, 0.0 = pad

    # ---- geometry, computed once (coords are fixed across GearNet layers) ---
    d2 = jnp.zeros((B, N, N), jnp.float32)
    for k in range(3):                  # x/y/z planes kept lane-dense (B, N)
        c = coord_ref[k]                # (B, N)
        d = c[:, :, None] - c[:, None, :]
        d2 = d2 + d * d
    dist = jnp.sqrt(d2)                 # (B, N, N)

    ii = jax.lax.broadcasted_iota(jnp.int32, (N, N), 0)
    jj = jax.lax.broadcasted_iota(jnp.int32, (N, N), 1)
    notself = (ii != jj).astype(jnp.float32)                   # (N, N)
    vmask = valid[:, :, None] * valid[:, None, :]              # (B, N, N)
    # TODO(synk): torch_cluster radius_graph's max_num_neighbors=32 truncation
    # is not modeled (it can never bind with N=8 nodes per graph).
    adj = (dist <= RADIUS).astype(jnp.float32) * notself[None] * vmask

    adj4 = adj[..., None]               # (B, N, N, 1)  hoisted out of the loop
    dist4 = dist[..., None]             # (B, N, N, 1)

    for l in range(L):                  # layers unrolled at trace time
        w1a = wmat_ref[l, 0]            # (D, D) first-MLP weight, x[col] half
        w2 = wmat_ref[l, 1]             # (D, D) second MLP linear
        we1b = wvec_ref[l, 0]           # (1, D) edge_mlp.weight folded via w1b
        be1b = wvec_ref[l, 1]           # (1, D) edge_mlp.bias folded + b1
        b2 = wvec_ref[l, 2]             # (1, D)

        # x[col] @ w1a at node level (sender-only term, no per-edge matmul)
        xa = jnp.dot(x, w1a, preferred_element_type=jnp.float32)   # (BN, D)
        hidden = (xa.reshape(B, 1, N, D)        # broadcast over receivers i
                  + dist4 * we1b + be1b)        # (B, N, N, D)
        h = jnp.maximum(hidden, 0.0)            # ReLU
        msg = jnp.dot(h.reshape(BE, D), w2,
                      preferred_element_type=jnp.float32) + b2      # (BE, D)
        # agg.index_add_(0, row, msg)  ==  masked sum over the sender axis j
        agg = jnp.sum(adj4 * msg.reshape(B, N, N, D), axis=2)       # (B, N, D)
        x = x + agg.reshape(BN, D)

    # out = zeros; out[mask] = x  (zero the padded positions)
    out_ref[...] = x.reshape(B, N, D) * valid[:, :, None]


# ------------------------------ wrapper --------------------------------------
def simple_gearnet_forward(params, src_tokens, padded_coordinates,
                           src_distance=None, src_edge_type=None):
    del src_distance, src_edge_type      # unused by the reference forward
    src_tokens = src_tokens.astype(jnp.int32)
    padding_mask = src_tokens == PAD                         # (B, N) bool
    valid = (~padding_mask).astype(jnp.float32)              # (B, N)

    # token embedding gather (glue, outside the kernel)
    x0 = jnp.take(params["embed"], src_tokens, axis=0).reshape(BN, D)
    coordT = jnp.transpose(padded_coordinates.astype(jnp.float32),
                           (2, 0, 1))                        # (3, B, N)

    # Fold edge_mlp (Linear(1, D)) through the edge-attr half of mlp[0]:
    #   edge_attr @ w1b = dist * (w_e @ w1b) + (b_e @ w1b)
    we1b = jnp.einsum("ld,lde->le", params["w_e"], params["w1b"])          # (L, D)
    be1b = jnp.einsum("ld,lde->le", params["b_e"], params["w1b"]) + params["b1"]

    wmats = jnp.stack([params["w1a"], params["w2"]], axis=1)               # (L,2,D,D)
    wvecs = jnp.stack([we1b, be1b, params["b2"]], axis=1)[:, :, None, :]   # (L,3,1,D)

    vspec = pl.BlockSpec(memory_space=pltpu.MemorySpace.VMEM)
    encoder_rep = pl.pallas_call(
        gearnet_kernel,
        out_shape=jax.ShapeDtypeStruct((B, N, D), jnp.float32),
        in_specs=[vspec] * 5,
        out_specs=vspec,
    )(x0, coordT, valid, wmats, wvecs)

    return encoder_rep, padding_mask


# ----------------------- deterministic parameter init ------------------------
def init_params(key):
    ks = jax.random.split(key, 8)
    s = 1.0 / jnp.sqrt(jnp.float32(D))

    def w(k, shape, scale):
        return jax.random.normal(k, shape, dtype=jnp.float32) * scale

    emb = jax.random.normal(ks[0], (V, D), dtype=jnp.float32)
    emb = emb.at[PAD].set(0.0)           # nn.Embedding padding_idx row is zero
    return {
        "embed": emb,
        # edge_mlp: Linear(1, D)  (weights stored input-major / transposed)
        "w_e": w(ks[1], (L, D), 0.5),
        "b_e": w(ks[2], (L, D), 0.1),
        # mlp[0]: Linear(2D, D) split into [x[col] | edge_attr] halves
        "w1a": w(ks[3], (L, D, D), s),
        "w1b": w(ks[4], (L, D, D), s),
        "b1":  w(ks[5], (L, D), 0.05),
        # mlp[2]: Linear(D, D)
        "w2":  w(ks[6], (L, D, D), s),
        "b2":  w(ks[7], (L, D), 0.05),
    }


# --------------------------- plain-JAX reference -----------------------------
def gearnet_reference(params, src_tokens, coords):
    padding_mask = src_tokens == PAD
    validf = (~padding_mask).astype(jnp.float32)             # (B, N)
    x = jnp.take(params["embed"], src_tokens, axis=0)        # (B, N, D)
    coord = coords.astype(jnp.float32)

    diff = coord[:, :, None, :] - coord[:, None, :, :]
    dist = jnp.sqrt(jnp.sum(diff * diff, axis=-1))           # (B, N, N)
    eye = jnp.eye(N, dtype=bool)[None]
    adj = ((dist <= RADIUS) & (~eye)
           & (validf[:, :, None] > 0) & (validf[:, None, :] > 0)).astype(jnp.float32)

    for l in range(L):
        edge_attr = dist[..., None] * params["w_e"][l] + params["b_e"][l]  # (B,N,N,D)
        hidden = (x[:, None, :, :] @ params["w1a"][l]        # x[col] term
                  + edge_attr @ params["w1b"][l] + params["b1"][l])
        msg = jnp.maximum(hidden, 0.0) @ params["w2"][l] + params["b2"][l]
        agg = jnp.sum(adj[..., None] * msg, axis=2)          # (B, N, D)
        x = x + agg

    return x * validf[..., None], padding_mask


if __name__ == "__main__":
    key = jax.random.PRNGKey(0)
    kp, kt, kc = jax.random.split(key, 3)
    params = init_params(kp)

    src_tokens = jax.random.randint(kt, (B, N), 1, V, dtype=jnp.int32)
    src_tokens = src_tokens.at[1, N - 2:].set(PAD)     # some padding in batch 1
    padded_coordinates = jax.random.normal(kc, (B, N, 3), dtype=jnp.float32) * 2.5
    src_distance = jnp.zeros((B, N, N), dtype=jnp.float32)   # unused by forward
    src_edge_type = jnp.zeros((B, N, N), dtype=jnp.int32)    # unused by forward

    encoder_rep, padding_mask = simple_gearnet_forward(
        params, src_tokens, padded_coordinates, src_distance, src_edge_type)
    encoder_rep = jax.block_until_ready(encoder_rep)

    ref_rep, ref_mask = gearnet_reference(params, src_tokens, padded_coordinates)
    rel_err = float(jnp.max(jnp.abs(encoder_rep - ref_rep))
                    / (jnp.max(jnp.abs(ref_rep)) + 1e-6))

    assert encoder_rep.shape == (B, N, D)
    assert bool(jnp.all(padding_mask == ref_mask))
    assert bool(jnp.isfinite(encoder_rep).all())
    assert rel_err < 1e-3, f"mismatch vs reference: rel err {rel_err}"
    print("KERNEL_OK")
</pallas_src>

<mosaic_0001>
module attributes {stable_mosaic.version = 11 : i64} {
  func.func @gearnet_kernel(%arg0: memref<16x32xf32, #tpu.memory_space<vmem>>, %arg1: memref<3x2x8xf32, #tpu.memory_space<vmem>>, %arg2: memref<2x8xf32, #tpu.memory_space<vmem>>, %arg3: memref<4x2x32x32xf32, #tpu.memory_space<vmem>>, %arg4: memref<4x3x1x32xf32, #tpu.memory_space<vmem>>, %arg5: memref<2x8x32xf32, #tpu.memory_space<vmem>>) attributes {dimension_semantics = [], scalar_prefetch = 0 : i64, scratch_operands = 0 : i64, tpu.core_type = #tpu.core_type<tc>} {
    %c0 = arith.constant 0 : index
    %c0_0 = arith.constant 0 : index
    %0 = vector.load %arg0[%c0, %c0_0] : memref<16x32xf32, #tpu.memory_space<vmem>>, vector<16x32xf32>
    %c0_1 = arith.constant 0 : index
    %c0_2 = arith.constant 0 : index
    %1 = vector.load %arg2[%c0_1, %c0_2] : memref<2x8xf32, #tpu.memory_space<vmem>>, vector<2x8xf32>
    %cst = arith.constant 0.000000e+00 : f32
    %2 = vector.broadcast %cst : f32 to vector<2x8x8xf32>
    %c0_3 = arith.constant 0 : index
    %c0_4 = arith.constant 0 : index
    %c0_5 = arith.constant 0 : index
    %3 = vector.load %arg1[%c0_3, %c0_4, %c0_5] : memref<3x2x8xf32, #tpu.memory_space<vmem>>, vector<1x2x8xf32>
    %4 = vector.shape_cast %3 : vector<1x2x8xf32> to vector<2x8xf32>
    %5 = vector.shape_cast %4 : vector<2x8xf32> to vector<2x8x1xf32>
    %6 = vector.shape_cast %4 : vector<2x8xf32> to vector<2x1x8xf32>
    %7 = vector.broadcast %5 : vector<2x8x1xf32> to vector<2x8x8xf32>
    %8 = vector.broadcast %6 : vector<2x1x8xf32> to vector<2x8x8xf32>
    %9 = arith.subf %7, %8 : vector<2x8x8xf32>
    %10 = arith.mulf %9, %9 : vector<2x8x8xf32>
    %11 = arith.addf %2, %10 : vector<2x8x8xf32>
    %c1 = arith.constant 1 : index
    %c0_6 = arith.constant 0 : index
    %c0_7 = arith.constant 0 : index
    %12 = vector.load %arg1[%c1, %c0_6, %c0_7] : memref<3x2x8xf32, #tpu.memory_space<vmem>>, vector<1x2x8xf32>
    %13 = vector.shape_cast %12 : vector<1x2x8xf32> to vector<2x8xf32>
    %14 = vector.shape_cast %13 : vector<2x8xf32> to vector<2x8x1xf32>
    %15 = vector.shape_cast %13 : vector<2x8xf32> to vector<2x1x8xf32>
    %16 = vector.broadcast %14 : vector<2x8x1xf32> to vector<2x8x8xf32>
    %17 = vector.broadcast %15 : vector<2x1x8xf32> to vector<2x8x8xf32>
    %18 = arith.subf %16, %17 : vector<2x8x8xf32>
    %19 = arith.mulf %18, %18 : vector<2x8x8xf32>
    %20 = arith.addf %11, %19 : vector<2x8x8xf32>
    %c2 = arith.constant 2 : index
    %c0_8 = arith.constant 0 : index
    %c0_9 = arith.constant 0 : index
    %21 = vector.load %arg1[%c2, %c0_8, %c0_9] : memref<3x2x8xf32, #tpu.memory_space<vmem>>, vector<1x2x8xf32>
    %22 = vector.shape_cast %21 : vector<1x2x8xf32> to vector<2x8xf32>
    %23 = vector.shape_cast %22 : vector<2x8xf32> to vector<2x8x1xf32>
    %24 = vector.shape_cast %22 : vector<2x8xf32> to vector<2x1x8xf32>
    %25 = vector.broadcast %23 : vector<2x8x1xf32> to vector<2x8x8xf32>
    %26 = vector.broadcast %24 : vector<2x1x8xf32> to vector<2x8x8xf32>
    %27 = arith.subf %25, %26 : vector<2x8x8xf32>
    %28 = arith.mulf %27, %27 : vector<2x8x8xf32>
    %29 = arith.addf %20, %28 : vector<2x8x8xf32>
    %30 = math.sqrt %29 : vector<2x8x8xf32>
    %31 = tpu.iota {dimensions = array<i32: 0>} : vector<8x8xi32>
    %32 = tpu.iota {dimensions = array<i32: 1>} : vector<8x8xi32>
    %33 = arith.cmpi ne, %31, %32 : vector<8x8xi32>
    %34 = arith.extui %33 : vector<8x8xi1> to vector<8x8xi32>
    %35 = arith.sitofp %34 : vector<8x8xi32> to vector<8x8xf32>
    %36 = vector.shape_cast %1 : vector<2x8xf32> to vector<2x8x1xf32>
    %37 = vector.shape_cast %1 : vector<2x8xf32> to vector<2x1x8xf32>
    %38 = vector.broadcast %36 : vector<2x8x1xf32> to vector<2x8x8xf32>
    %39 = vector.broadcast %37 : vector<2x1x8xf32> to vector<2x8x8xf32>
    %40 = arith.mulf %38, %39 : vector<2x8x8xf32>
    %cst_10 = arith.constant 6.000000e+00 : f32
    %41 = vector.broadcast %cst_10 : f32 to vector<2x8x8xf32>
    %42 = arith.cmpf ole, %30, %41 : vector<2x8x8xf32>
    %43 = arith.extui %42 : vector<2x8x8xi1> to vector<2x8x8xi32>
    %44 = arith.sitofp %43 : vector<2x8x8xi32> to vector<2x8x8xf32>
    %45 = vector.shape_cast %35 : vector<8x8xf32> to vector<1x8x8xf32>
    %46 = vector.broadcast %45 : vector<1x8x8xf32> to vector<2x8x8xf32>
    %47 = arith.mulf %44, %46 : vector<2x8x8xf32>
    %48 = arith.mulf %47, %40 : vector<2x8x8xf32>
    %49 = vector.shape_cast %48 : vector<2x8x8xf32> to vector<2x8x8x1xf32>
    %50 = vector.shape_cast %30 : vector<2x8x8xf32> to vector<2x8x8x1xf32>
    %c0_11 = arith.constant 0 : index
    %c0_12 = arith.constant 0 : index
    %c0_13 = arith.constant 0 : index
    %c0_14 = arith.constant 0 : index
    %51 = vector.load %arg3[%c0_11, %c0_12, %c0_13, %c0_14] : memref<4x2x32x32xf32, #tpu.memory_space<vmem>>, vector<1x1x32x32xf32>
    %52 = vector.shape_cast %51 : vector<1x1x32x32xf32> to vector<32x32xf32>
    %c0_15 = arith.constant 0 : index
    %c1_16 = arith.constant 1 : index
    %c0_17 = arith.constant 0 : index
    %c0_18 = arith.constant 0 : index
    %53 = vector.load %arg3[%c0_15, %c1_16, %c0_17, %c0_18] : memref<4x2x32x32xf32, #tpu.memory_space<vmem>>, vector<1x1x32x32xf32>
    %54 = vector.shape_cast %53 : vector<1x1x32x32xf32> to vector<32x32xf32>
    %c0_19 = arith.constant 0 : index
    %c0_20 = arith.constant 0 : index
    %c0_21 = arith.constant 0 : index
    %c0_22 = arith.constant 0 : index
    %55 = vector.load %arg4[%c0_19, %c0_20, %c0_21, %c0_22] : memref<4x3x1x32xf32, #tpu.memory_space<vmem>>, vector<1x1x1x32xf32>
    %56 = vector.shape_cast %55 : vector<1x1x1x32xf32> to vector<1x32xf32>
    %c0_23 = arith.constant 0 : index
    %c1_24 = arith.constant 1 : index
    %c0_25 = arith.constant 0 : index
    %c0_26 = arith.constant 0 : index
    %57 = vector.load %arg4[%c0_23, %c1_24, %c0_25, %c0_26] : memref<4x3x1x32xf32, #tpu.memory_space<vmem>>, vector<1x1x1x32xf32>
    %58 = vector.shape_cast %57 : vector<1x1x1x32xf32> to vector<1x32xf32>
    %c0_27 = arith.constant 0 : index
    %c2_28 = arith.constant 2 : index
    %c0_29 = arith.constant 0 : index
    %c0_30 = arith.constant 0 : index
    %59 = vector.load %arg4[%c0_27, %c2_28, %c0_29, %c0_30] : memref<4x3x1x32xf32, #tpu.memory_space<vmem>>, vector<1x1x1x32xf32>
    %60 = vector.shape_cast %59 : vector<1x1x1x32xf32> to vector<1x32xf32>
    %cst_31 = arith.constant dense<0.000000e+00> : vector<16x32xf32>
    %61 = tpu.matmul %0, %52, %cst_31 {dimension_numbers = #tpu.dot_dimension_numbers<[1], [0], [0], [1], [0, 0, 1, 1], [], []>} : vector<16x32xf32>, vector<32x32xf32>, vector<16x32xf32> -> vector<16x32xf32>
    %62 = vector.shape_cast %61 : vector<16x32xf32> to vector<2x1x8x32xf32>
    %63 = vector.shape_cast %56 : vector<1x32xf32> to vector<1x1x1x32xf32>
    %64 = vector.broadcast %50 : vector<2x8x8x1xf32> to vector<2x8x8x32xf32>
    %65 = vector.broadcast %63 : vector<1x1x1x32xf32> to vector<2x8x8x32xf32>
    %66 = arith.mulf %64, %65 : vector<2x8x8x32xf32>
    %67 = vector.broadcast %62 : vector<2x1x8x32xf32> to vector<2x8x8x32xf32>
    %68 = arith.addf %67, %66 : vector<2x8x8x32xf32>
    %69 = vector.shape_cast %58 : vector<1x32xf32> to vector<1x1x1x32xf32>
    %70 = vector.broadcast %69 : vector<1x1x1x32xf32> to vector<2x8x8x32xf32>
    %71 = arith.addf %68, %70 : vector<2x8x8x32xf32>
    %cst_32 = arith.constant 0.000000e+00 : f32
    %72 = vector.broadcast %cst_32 : f32 to vector<2x8x8x32xf32>
    %73 = arith.maximumf %71, %72 : vector<2x8x8x32xf32>
    %74 = vector.shape_cast %73 : vector<2x8x8x32xf32> to vector<128x32xf32>
    %cst_33 = arith.constant dense<0.000000e+00> : vector<128x32xf32>
    %75 = tpu.matmul %74, %54, %cst_33 {dimension_numbers = #tpu.dot_dimension_numbers<[1], [0], [0], [1], [0, 0, 1, 1], [], []>} : vector<128x32xf32>, vector<32x32xf32>, vector<128x32xf32> -> vector<128x32xf32>
    %76 = vector.broadcast %60 : vector<1x32xf32> to vector<128x32xf32>
    %77 = arith.addf %75, %76 : vector<128x32xf32>
    %78 = vector.shape_cast %77 : vector<128x32xf32> to vector<2x8x8x32xf32>
    %79 = vector.broadcast %49 : vector<2x8x8x1xf32> to vector<2x8x8x32xf32>
    %80 = arith.mulf %79, %78 : vector<2x8x8x32xf32>
    %cst_34 = arith.constant dense<0.000000e+00> : vector<2x8x32xf32>
    %81 = vector.multi_reduction <add>, %80, %cst_34 [2] : vector<2x8x8x32xf32> to vector<2x8x32xf32>
    %82 = vector.shape_cast %81 : vector<2x8x32xf32> to vector<16x32xf32>
    %83 = arith.addf %0, %82 : vector<16x32xf32>
    %c1_35 = arith.constant 1 : index
    %c0_36 = arith.constant 0 : index
    %c0_37 = arith.constant 0 : index
    %c0_38 = arith.constant 0 : index
    %84 = vector.load %arg3[%c1_35, %c0_36, %c0_37, %c0_38] : memref<4x2x32x32xf32, #tpu.memory_space<vmem>>, vector<1x1x32x32xf32>
    %85 = vector.shape_cast %84 : vector<1x1x32x32xf32> to vector<32x32xf32>
    %c1_39 = arith.constant 1 : index
    %c1_40 = arith.constant 1 : index
    %c0_41 = arith.constant 0 : index
    %c0_42 = arith.constant 0 : index
    %86 = vector.load %arg3[%c1_39, %c1_40, %c0_41, %c0_42] : memref<4x2x32x32xf32, #tpu.memory_space<vmem>>, vector<1x1x32x32xf32>
    %87 = vector.shape_cast %86 : vector<1x1x32x32xf32> to vector<32x32xf32>
    %c1_43 = arith.constant 1 : index
    %c0_44 = arith.constant 0 : index
    %c0_45 = arith.constant 0 : index
    %c0_46 = arith.constant 0 : index
    %88 = vector.load %arg4[%c1_43, %c0_44, %c0_45, %c0_46] : memref<4x3x1x32xf32, #tpu.memory_space<vmem>>, vector<1x1x1x32xf32>
    %89 = vector.shape_cast %88 : vector<1x1x1x32xf32> to vector<1x32xf32>
    %c1_47 = arith.constant 1 : index
    %c1_48 = arith.constant 1 : index
    %c0_49 = arith.constant 0 : index
    %c0_50 = arith.constant 0 : index
    %90 = vector.load %arg4[%c1_47, %c1_48, %c0_49, %c0_50] : memref<4x3x1x32xf32, #tpu.memory_space<vmem>>, vector<1x1x1x32xf32>
    %91 = vector.shape_cast %90 : vector<1x1x1x32xf32> to vector<1x32xf32>
    %c1_51 = arith.constant 1 : index
    %c2_52 = arith.constant 2 : index
    %c0_53 = arith.constant 0 : index
    %c0_54 = arith.constant 0 : index
    %92 = vector.load %arg4[%c1_51, %c2_52, %c0_53, %c0_54] : memref<4x3x1x32xf32, #tpu.memory_space<vmem>>, vector<1x1x1x32xf32>
    %93 = vector.shape_cast %92 : vector<1x1x1x32xf32> to vector<1x32xf32>
    %cst_55 = arith.constant dense<0.000000e+00> : vector<16x32xf32>
    %94 = tpu.matmul %83, %85, %cst_55 {dimension_numbers = #tpu.dot_dimension_numbers<[1], [0], [0], [1], [0, 0, 1, 1], [], []>} : vector<16x32xf32>, vector<32x32xf32>, vector<16x32xf32> -> vector<16x32xf32>
    %95 = vector.shape_cast %94 : vector<16x32xf32> to vector<2x1x8x32xf32>
    %96 = vector.shape_cast %89 : vector<1x32xf32> to vector<1x1x1x32xf32>
    %97 = vector.broadcast %50 : vector<2x8x8x1xf32> to vector<2x8x8x32xf32>
    %98 = vector.broadcast %96 : vector<1x1x1x32xf32> to vector<2x8x8x32xf32>
    %99 = arith.mulf %97, %98 : vector<2x8x8x32xf32>
    %100 = vector.broadcast %95 : vector<2x1x8x32xf32> to vector<2x8x8x32xf32>
    %101 = arith.addf %100, %99 : vector<2x8x8x32xf32>
    %102 = vector.shape_cast %91 : vector<1x32xf32> to vector<1x1x1x32xf32>
    %103 = vector.broadcast %102 : vector<1x1x1x32xf32> to vector<2x8x8x32xf32>
    %104 = arith.addf %101, %103 : vector<2x8x8x32xf32>
    %cst_56 = arith.constant 0.000000e+00 : f32
    %105 = vector.broadcast %cst_56 : f32 to vector<2x8x8x32xf32>
    %106 = arith.maximumf %104, %105 : vector<2x8x8x32xf32>
    %107 = vector.shape_cast %106 : vector<2x8x8x32xf32> to vector<128x32xf32>
    %cst_57 = arith.constant dense<0.000000e+00> : vector<128x32xf32>
    %108 = tpu.matmul %107, %87, %cst_57 {dimension_numbers = #tpu.dot_dimension_numbers<[1], [0], [0], [1], [0, 0, 1, 1], [], []>} : vector<128x32xf32>, vector<32x32xf32>, vector<128x32xf32> -> vector<128x32xf32>
    %109 = vector.broadcast %93 : vector<1x32xf32> to vector<128x32xf32>
    %110 = arith.addf %108, %109 : vector<128x32xf32>
    %111 = vector.shape_cast %110 : vector<128x32xf32> to vector<2x8x8x32xf32>
    %112 = vector.broadcast %49 : vector<2x8x8x1xf32> to vector<2x8x8x32xf32>
    %113 = arith.mulf %112, %111 : vector<2x8x8x32xf32>
    %cst_58 = arith.constant dense<0.000000e+00> : vector<2x8x32xf32>
    %114 = vector.multi_reduction <add>, %113, %cst_58 [2] : vector<2x8x8x32xf32> to vector<2x8x32xf32>
    %115 = vector.shape_cast %114 : vector<2x8x32xf32> to vector<16x32xf32>
    %116 = arith.addf %83, %115 : vector<16x32xf32>
    %c2_59 = arith.constant 2 : index
    %c0_60 = arith.constant 0 : index
    %c0_61 = arith.constant 0 : index
    %c0_62 = arith.constant 0 : index
    %117 = vector.load %arg3[%c2_59, %c0_60, %c0_61, %c0_62] : memref<4x2x32x32xf32, #tpu.memory_space<vmem>>, vector<1x1x32x32xf32>
    %118 = vector.shape_cast %117 : vector<1x1x32x32xf32> to vector<32x32xf32>
    %c2_63 = arith.constant 2 : index
    %c1_64 = arith.constant 1 : index
    %c0_65 = arith.constant 0 : index
    %c0_66 = arith.constant 0 : index
    %119 = vector.load %arg3[%c2_63, %c1_64, %c0_65, %c0_66] : memref<4x2x32x32xf32, #tpu.memory_space<vmem>>, vector<1x1x32x32xf32>
    %120 = vector.shape_cast %119 : vector<1x1x32x32xf32> to vector<32x32xf32>
    %c2_67 = arith.constant 2 : index
    %c0_68 = arith.constant 0 : index
    %c0_69 = arith.constant 0 : index
    %c0_70 = arith.constant 0 : index
    %121 = vector.load %arg4[%c2_67, %c0_68, %c0_69, %c0_70] : memref<4x3x1x32xf32, #tpu.memory_space<vmem>>, vector<1x1x1x32xf32>
    %122 = vector.shape_cast %121 : vector<1x1x1x32xf32> to vector<1x32xf32>
    %c2_71 = arith.constant 2 : index
    %c1_72 = arith.constant 1 : index
    %c0_73 = arith.constant 0 : index
    %c0_74 = arith.constant 0 : index
    %123 = vector.load %arg4[%c2_71, %c1_72, %c0_73, %c0_74] : memref<4x3x1x32xf32, #tpu.memory_space<vmem>>, vector<1x1x1x32xf32>
    %124 = vector.shape_cast %123 : vector<1x1x1x32xf32> to vector<1x32xf32>
    %c2_75 = arith.constant 2 : index
    %c2_76 = arith.constant 2 : index
    %c0_77 = arith.constant 0 : index
    %c0_78 = arith.constant 0 : index
    %125 = vector.load %arg4[%c2_75, %c2_76, %c0_77, %c0_78] : memref<4x3x1x32xf32, #tpu.memory_space<vmem>>, vector<1x1x1x32xf32>
    %126 = vector.shape_cast %125 : vector<1x1x1x32xf32> to vector<1x32xf32>
    %cst_79 = arith.constant dense<0.000000e+00> : vector<16x32xf32>
    %127 = tpu.matmul %116, %118, %cst_79 {dimension_numbers = #tpu.dot_dimension_numbers<[1], [0], [0], [1], [0, 0, 1, 1], [], []>} : vector<16x32xf32>, vector<32x32xf32>, vector<16x32xf32> -> vector<16x32xf32>
    %128 = vector.shape_cast %127 : vector<16x32xf32> to vector<2x1x8x32xf32>
    %129 = vector.shape_cast %122 : vector<1x32xf32> to vector<1x1x1x32xf32>
    %130 = vector.broadcast %50 : vector<2x8x8x1xf32> to vector<2x8x8x32xf32>
    %131 = vector.broadcast %129 : vector<1x1x1x32xf32> to vector<2x8x8x32xf32>
    %132 = arith.mulf %130, %131 : vector<2x8x8x32xf32>
    %133 = vector.broadcast %128 : vector<2x1x8x32xf32> to vector<2x8x8x32xf32>
    %134 = arith.addf %133, %132 : vector<2x8x8x32xf32>
    %135 = vector.shape_cast %124 : vector<1x32xf32> to vector<1x1x1x32xf32>
    %136 = vector.broadcast %135 : vector<1x1x1x32xf32> to vector<2x8x8x32xf32>
    %137 = arith.addf %134, %136 : vector<2x8x8x32xf32>
    %cst_80 = arith.constant 0.000000e+00 : f32
    %138 = vector.broadcast %cst_80 : f32 to vector<2x8x8x32xf32>
    %139 = arith.maximumf %137, %138 : vector<2x8x8x32xf32>
    %140 = vector.shape_cast %139 : vector<2x8x8x32xf32> to vector<128x32xf32>
    %cst_81 = arith.constant dense<0.000000e+00> : vector<128x32xf32>
    %141 = tpu.matmul %140, %120, %cst_81 {dimension_numbers = #tpu.dot_dimension_numbers<[1], [0], [0], [1], [0, 0, 1, 1], [], []>} : vector<128x32xf32>, vector<32x32xf32>, vector<128x32xf32> -> vector<128x32xf32>
    %142 = vector.broadcast %126 : vector<1x32xf32> to vector<128x32xf32>
    %143 = arith.addf %141, %142 : vector<128x32xf32>
    %144 = vector.shape_cast %143 : vector<128x32xf32> to vector<2x8x8x32xf32>
    %145 = vector.broadcast %49 : vector<2x8x8x1xf32> to vector<2x8x8x32xf32>
    %146 = arith.mulf %145, %144 : vector<2x8x8x32xf32>
    %cst_82 = arith.constant dense<0.000000e+00> : vector<2x8x32xf32>
    %147 = vector.multi_reduction <add>, %146, %cst_82 [2] : vector<2x8x8x32xf32> to vector<2x8x32xf32>
    %148 = vector.shape_cast %147 : vector<2x8x32xf32> to vector<16x32xf32>
    %149 = arith.addf %116, %148 : vector<16x32xf32>
    %c3 = arith.constant 3 : index
    %c0_83 = arith.constant 0 : index
    %c0_84 = arith.constant 0 : index
    %c0_85 = arith.constant 0 : index
    %150 = vector.load %arg3[%c3, %c0_83, %c0_84, %c0_85] : memref<4x2x32x32xf32, #tpu.memory_space<vmem>>, vector<1x1x32x32xf32>
    %151 = vector.shape_cast %150 : vector<1x1x32x32xf32> to vector<32x32xf32>
    %c3_86 = arith.constant 3 : index
    %c1_87 = arith.constant 1 : index
    %c0_88 = arith.constant 0 : index
    %c0_89 = arith.constant 0 : index
    %152 = vector.load %arg3[%c3_86, %c1_87, %c0_88, %c0_89] : memref<4x2x32x32xf32, #tpu.memory_space<vmem>>, vector<1x1x32x32xf32>
    %153 = vector.shape_cast %152 : vector<1x1x32x32xf32> to vector<32x32xf32>
    %c3_90 = arith.constant 3 : index
    %c0_91 = arith.constant 0 : index
    %c0_92 = arith.constant 0 : index
    %c0_93 = arith.constant 0 : index
    %154 = vector.load %arg4[%c3_90, %c0_91, %c0_92, %c0_93] : memref<4x3x1x32xf32, #tpu.memory_space<vmem>>, vector<1x1x1x32xf32>
    %155 = vector.shape_cast %154 : vector<1x1x1x32xf32> to vector<1x32xf32>
    %c3_94 = arith.constant 3 : index
    %c1_95 = arith.constant 1 : index
    %c0_96 = arith.constant 0 : index
    %c0_97 = arith.constant 0 : index
    %156 = vector.load %arg4[%c3_94, %c1_95, %c0_96, %c0_97] : memref<4x3x1x32xf32, #tpu.memory_space<vmem>>, vector<1x1x1x32xf32>
    %157 = vector.shape_cast %156 : vector<1x1x1x32xf32> to vector<1x32xf32>
    %c3_98 = arith.constant 3 : index
    %c2_99 = arith.constant 2 : index
    %c0_100 = arith.constant 0 : index
    %c0_101 = arith.constant 0 : index
    %158 = vector.load %arg4[%c3_98, %c2_99, %c0_100, %c0_101] : memref<4x3x1x32xf32, #tpu.memory_space<vmem>>, vector<1x1x1x32xf32>
    %159 = vector.shape_cast %158 : vector<1x1x1x32xf32> to vector<1x32xf32>
    %cst_102 = arith.constant dense<0.000000e+00> : vector<16x32xf32>
    %160 = tpu.matmul %149, %151, %cst_102 {dimension_numbers = #tpu.dot_dimension_numbers<[1], [0], [0], [1], [0, 0, 1, 1], [], []>} : vector<16x32xf32>, vector<32x32xf32>, vector<16x32xf32> -> vector<16x32xf32>
    %161 = vector.shape_cast %160 : vector<16x32xf32> to vector<2x1x8x32xf32>
    %162 = vector.shape_cast %155 : vector<1x32xf32> to vector<1x1x1x32xf32>
    %163 = vector.broadcast %50 : vector<2x8x8x1xf32> to vector<2x8x8x32xf32>
    %164 = vector.broadcast %162 : vector<1x1x1x32xf32> to vector<2x8x8x32xf32>
    %165 = arith.mulf %163, %164 : vector<2x8x8x32xf32>
    %166 = vector.broadcast %161 : vector<2x1x8x32xf32> to vector<2x8x8x32xf32>
    %167 = arith.addf %166, %165 : vector<2x8x8x32xf32>
    %168 = vector.shape_cast %157 : vector<1x32xf32> to vector<1x1x1x32xf32>
    %169 = vector.broadcast %168 : vector<1x1x1x32xf32> to vector<2x8x8x32xf32>
    %170 = arith.addf %167, %169 : vector<2x8x8x32xf32>
    %cst_103 = arith.constant 0.000000e+00 : f32
    %171 = vector.broadcast %cst_103 : f32 to vector<2x8x8x32xf32>
    %172 = arith.maximumf %170, %171 : vector<2x8x8x32xf32>
    %173 = vector.shape_cast %172 : vector<2x8x8x32xf32> to vector<128x32xf32>
    %cst_104 = arith.constant dense<0.000000e+00> : vector<128x32xf32>
    %174 = tpu.matmul %173, %153, %cst_104 {dimension_numbers = #tpu.dot_dimension_numbers<[1], [0], [0], [1], [0, 0, 1, 1], [], []>} : vector<128x32xf32>, vector<32x32xf32>, vector<128x32xf32> -> vector<128x32xf32>
    %175 = vector.broadcast %159 : vector<1x32xf32> to vector<128x32xf32>
    %176 = arith.addf %174, %175 : vector<128x32xf32>
    %177 = vector.shape_cast %176 : vector<128x32xf32> to vector<2x8x8x32xf32>
    %178 = vector.broadcast %49 : vector<2x8x8x1xf32> to vector<2x8x8x32xf32>
    %179 = arith.mulf %178, %177 : vector<2x8x8x32xf32>
    %cst_105 = arith.constant dense<0.000000e+00> : vector<2x8x32xf32>
    %180 = vector.multi_reduction <add>, %179, %cst_105 [2] : vector<2x8x8x32xf32> to vector<2x8x32xf32>
    %181 = vector.shape_cast %180 : vector<2x8x32xf32> to vector<16x32xf32>
    %182 = arith.addf %149, %181 : vector<16x32xf32>
    %183 = vector.shape_cast %182 : vector<16x32xf32> to vector<2x8x32xf32>
    %184 = vector.shape_cast %1 : vector<2x8xf32> to vector<2x8x1xf32>
    %185 = vector.broadcast %184 : vector<2x8x1xf32> to vector<2x8x32xf32>
    %186 = arith.mulf %183, %185 : vector<2x8x32xf32>
    %c0_106 = arith.constant 0 : index
    %c0_107 = arith.constant 0 : index
    %c0_108 = arith.constant 0 : index
    %187 = vector.load %arg5[%c0_106, %c0_107, %c0_108] : memref<2x8x32xf32, #tpu.memory_space<vmem>>, vector<2x8x32xf32>
    tpu.vector_store %arg5[%c0_106, %c0_107, %c0_108], %186 {strides = array<i32>} : memref<2x8x32xf32, #tpu.memory_space<vmem>>, vector<2x8x32xf32>,
    return
  }
}

</mosaic_0001>

<llo_original>
// kernel: tpu_custom_call.1
$region0: #{tpu_custom_call.1}
  #allocation0 [shape = 'u32[]', space=smem, size = 0x4, offset = 0x4, fixed_abs, tag = 'smem constant byte address 0x4 - core index']
  #allocation1 [shape = 'u32[72,128]{1,0:T(1,128)}', space=vmem, size = 0x9000, scoped, tag = 'internal scratch']
  %s0 = inlined_call_operand.hbm [shape: f32[16,32], index: 0, kind: input, shape index: {}]
  %s1 = inlined_call_operand.hbm [shape: f32[3,2,8], index: 1, kind: input, shape index: {}]
  %s2 = inlined_call_operand.hbm [shape: f32[2,8], index: 2, kind: input, shape index: {}]
  %s3 = inlined_call_operand.hbm [shape: f32[4,2,32,32], index: 3, kind: input, shape index: {}]
  %s4 = inlined_call_operand.hbm [shape: f32[4,3,1,32], index: 4, kind: input, shape index: {}]
  %s5 = inlined_call_operand.hbm [shape: f32[2,8,32], index: 5, kind: output, shape index: {}]
  %s6 = sld [smem:[#allocation0]]
  $region50: #{tpu_custom_call.1} parent=0
    _
  %s8 = ssub.s32 1, %s6
  %s9 = scalar_select 0, %s8, %s6
  $region1: #{tpu_custom_call.1} parent=0
    #allocation2 [shape = 'u8[8192]{0}', space=vmem, size = 0x2000, scoped, tag = 'input window, operand 0, single buffered']
    #allocation3 [shape = 's32[1]{0}', space=sflag, size = 0x4, scoped, tag = 'scoped memory for tpu_custom_call.1']
    #allocation4 [shape = 's32[1]{0}', space=sflag, size = 0x4, scoped, tag = 'scoped memory for tpu_custom_call.1']
    #allocation5 [shape = 'u8[3072]{0}', space=vmem, size = 0xc00, scoped, tag = 'input window, operand 1, single buffered']
    #allocation6 [shape = 's32[1]{0}', space=sflag, size = 0x4, scoped, tag = 'scoped memory for tpu_custom_call.1']
    #allocation7 [shape = 'u8[1024]{0}', space=vmem, size = 0x400, scoped, tag = 'input window, operand 2, single buffered']
    #allocation8 [shape = 'u8[131072]{0}', space=vmem, size = 0x20000, scoped, tag = 'input window, operand 3, single buffered']
    #allocation9 [shape = 's32[1]{0}', space=sflag, size = 0x4, scoped, tag = 'scoped memory for tpu_custom_call.1']
    #allocation10 [shape = 'u8[6144]{0}', space=vmem, size = 0x1800, scoped, tag = 'input window, operand 4, single buffered']
    #allocation11 [shape = 'u8[8192]{0}', space=vmem, size = 0x2000, scoped, tag = 'output window, operand 0, single buffered']
    %10 = vsyncpa [#allocation3], 0
    %11 = vsyncpa [#allocation6], 0
    %12 = vsyncpa [#allocation9], 0
    %13 = vsyncpa [#allocation4], 0
    // Predicated region
    $region2: #{tpu_custom_call.1} parent=1 // pred_check
      _
    $region3: #{tpu_custom_call.1} parent=1 // pred_check_branch
      %15 = sbr.rel (0) target = $region5
    $region4: #{tpu_custom_call.1} parent=1 // pred_region
      %17 = vsyncadd [#allocation3], 0
      %s18 = sshll.u32 %s0, 4
      %s19 = int_to_ptr.hbm [resolvable:$true] %s18
      %s20 = sshll.u32 [#allocation2], 4
      %s21 = int_to_ptr.vmem [resolvable:$true] %s20
      %26 = dma.hbm_to_vmem [thread:$0]  %s19, 256, %s21, [#allocation3], 128, 128, 8
    $region5: #{tpu_custom_call.1} parent=1 // pred_fallthru
      _
    // Predicated region
    $region6: #{tpu_custom_call.1} parent=1 // pred_check
      _
    $region7: #{tpu_custom_call.1} parent=1 // pred_check_branch
      %28 = sbr.rel (0) target = $region9
    $region8: #{tpu_custom_call.1} parent=1 // pred_region
      %30 = vsyncadd [#allocation6], 0
      %s31 = sshll.u32 %s1, 4
      %s32 = int_to_ptr.hbm [resolvable:$true] %s31
      %s33 = sshll.u32 [#allocation5], 4
      %s34 = int_to_ptr.vmem [resolvable:$true] %s33
      %39 = dma.hbm_to_vmem [thread:$0]  %s32, 96, %s34, [#allocation6], 32, 32, 2
    $region9: #{tpu_custom_call.1} parent=1 // pred_fallthru
      _
    // Predicated region
    $region10: #{tpu_custom_call.1} parent=1 // pred_check
      _
    $region11: #{tpu_custom_call.1} parent=1 // pred_check_branch
      %41 = sbr.rel (0) target = $region13
    $region12: #{tpu_custom_call.1} parent=1 // pred_region
      %43 = vsyncadd [#allocation6], 0
      %s45 = sshll.u32 %s2, 4
      %s46 = int_to_ptr.hbm [resolvable:$true] %s45
      %s47 = sshll.u32 [#allocation7], 4
      %s48 = int_to_ptr.vmem [resolvable:$true] %s47
      %50 = dma.hbm_to_vmem [thread:$0]  %s46, 32, %s48, [#allocation6]
    $region13: #{tpu_custom_call.1} parent=1 // pred_fallthru
      _
    // Predicated region
    $region14: #{tpu_custom_call.1} parent=1 // pred_check
      _
    $region15: #{tpu_custom_call.1} parent=1 // pred_check_branch
      %52 = sbr.rel (0) target = $region17
    $region16: #{tpu_custom_call.1} parent=1 // pred_region
      %54 = vsyncadd [#allocation9], 0
      %s55 = sshll.u32 %s3, 4
      %s56 = int_to_ptr.hbm [resolvable:$true] %s55
      %s57 = sshll.u32 [#allocation8], 4
      %s58 = int_to_ptr.vmem [resolvable:$true] %s57
      %63 = dma.hbm_to_vmem [thread:$0]  %s56, 4096, %s58, [#allocation9], 128, 128, 8
    $region17: #{tpu_custom_call.1} parent=1 // pred_fallthru
      _
    // Predicated region
    $region18: #{tpu_custom_call.1} parent=1 // pred_check
      _
    $region19: #{tpu_custom_call.1} parent=1 // pred_check_branch
      %65 = sbr.rel (0) target = $region21
    $region20: #{tpu_custom_call.1} parent=1 // pred_region
      %67 = vsyncadd [#allocation9], 0
      %s68 = sshll.u32 %s4, 4
      %s69 = int_to_ptr.hbm [resolvable:$true] %s68
      %s70 = sshll.u32 [#allocation10], 4
      %s71 = int_to_ptr.vmem [resolvable:$true] %s70
      %76 = dma.hbm_to_vmem [thread:$0]  %s69, 192, %s71, [#allocation9], 16, 16, 1
    $region21: #{tpu_custom_call.1} parent=1 // pred_fallthru
      _
    // Predicated region
    $region22: #{tpu_custom_call.1} parent=1 // pred_check
      _
    $region23: #{tpu_custom_call.1} parent=1 // pred_check_branch
      %78 = sbr.rel (0) target = $region25
    $region24: #{tpu_custom_call.1} parent=1 // pred_region
      %80 = dma.done [#allocation3], 256
    $region25: #{tpu_custom_call.1} parent=1 // pred_fallthru
      _
    // Predicated region
    $region26: #{tpu_custom_call.1} parent=1 // pred_check
      _
    $region27: #{tpu_custom_call.1} parent=1 // pred_check_branch
      %82 = sbr.rel (0) target = $region29
    $region28: #{tpu_custom_call.1} parent=1 // pred_region
      %84 = dma.done [#allocation6], 96
    $region29: #{tpu_custom_call.1} parent=1 // pred_fallthru
      _
    // Predicated region
    $region30: #{tpu_custom_call.1} parent=1 // pred_check
      _
    $region31: #{tpu_custom_call.1} parent=1 // pred_check_branch
      %86 = sbr.rel (0) target = $region33
    $region32: #{tpu_custom_call.1} parent=1 // pred_region
      %88 = dma.done [#allocation6], 32
    $region33: #{tpu_custom_call.1} parent=1 // pred_fallthru
      _
    // Predicated region
    $region34: #{tpu_custom_call.1} parent=1 // pred_check
      _
    $region35: #{tpu_custom_call.1} parent=1 // pred_check_branch
      %90 = sbr.rel (0) target = $region37
    $region36: #{tpu_custom_call.1} parent=1 // pred_region
      %92 = dma.done [#allocation9], 4096
    $region37: #{tpu_custom_call.1} parent=1 // pred_fallthru
      _
    // Predicated region
    $region38: #{tpu_custom_call.1} parent=1 // pred_check
      _
    $region39: #{tpu_custom_call.1} parent=1 // pred_check_branch
      %94 = sbr.rel (0) target = $region41
    $region40: #{tpu_custom_call.1} parent=1 // pred_region
      %96 = dma.done [#allocation9], 192
    $region41: #{tpu_custom_call.1} parent=1 // pred_fallthru
      _
    %v97 = vld [vmem:[#allocation2] sm:$0xff]
    %v98 = vld [vmem:[#allocation2 + $0x8] sm:$0xff]
    %v99 = vld [vmem:[#allocation7] sm:$0x3]
    %v100 = vld [vmem:[#allocation5] sm:$0x3]
    %v101 = vperm.slane %v100, 0
    %v102 = vlaneseq
    %v103 = vshrl.u32 %v102, 7
    %105 = vset.pattern.permute.xlu0 %v103
    %106 = vperm.xlu0 %105, %v101
    %v107 = vpop.permute.xlu0 %106
    %v108 = vperm.slane %v100, 1
    %v109 = vlaneseq
    %v110 = vshrl.u32 %v109, 7
    %112 = vset.pattern.permute.xlu0 %v110
    %113 = vperm.xlu0 %112, %v108
    %v114 = vpop.permute.xlu0 %113
    %v116 = vrot.slane %v100, 1
    %v117 = vperm.slane %v100, 0
    %v118 = vperm.slane %v116, 0
    %v121 = vsub.f32 %v107, %v117
    %v122 = vsub.f32 %v114, %v118
    %v123 = vmul.f32 %v121, %v121
    %v124 = vmul.f32 %v122, %v122
    %v125 = vadd.f32 %v123, 0.0
    %v126 = vadd.f32 %v124, 0.0
    %s127 = scalar_lea.vmem [#allocation5], 2
    %v128 = vld [vmem:[%s127] sm:$0x3]
    %v129 = vperm.slane %v128, 0
    %v130 = vlaneseq
    %v131 = vshrl.u32 %v130, 7
    %133 = vset.pattern.permute.xlu0 %v131
    %134 = vperm.xlu0 %133, %v129
    %v135 = vpop.permute.xlu0 %134
    %v136 = vperm.slane %v128, 1
    %v137 = vlaneseq
    %v138 = vshrl.u32 %v137, 7
    %140 = vset.pattern.permute.xlu0 %v138
    %141 = vperm.xlu0 %140, %v136
    %v142 = vpop.permute.xlu0 %141
    %v144 = vrot.slane %v128, 1
    %v145 = vperm.slane %v128, 0
    %v146 = vperm.slane %v144, 0
    %v149 = vsub.f32 %v135, %v145
    %v150 = vsub.f32 %v142, %v146
    %v151 = vmul.f32 %v149, %v149
    %v152 = vmul.f32 %v150, %v150
    %v153 = vadd.f32 %v125, %v151
    %v154 = vadd.f32 %v126, %v152
    %s155 = scalar_lea.vmem [#allocation5], 4
    %v156 = vld [vmem:[%s155] sm:$0x3]
    %v157 = vperm.slane %v156, 0
    %v158 = vlaneseq
    %v159 = vshrl.u32 %v158, 7
    %161 = vset.pattern.permute.xlu0 %v159
    %162 = vperm.xlu0 %161, %v157
    %v163 = vpop.permute.xlu0 %162
    %v164 = vperm.slane %v156, 1
    %v165 = vlaneseq
    %v166 = vshrl.u32 %v165, 7
    %168 = vset.pattern.permute.xlu0 %v166
    %169 = vperm.xlu0 %168, %v164
    %v170 = vpop.permute.xlu0 %169
    %v172 = vrot.slane %v156, 1
    %v173 = vperm.slane %v156, 0
    %v174 = vperm.slane %v172, 0
    %v177 = vsub.f32 %v163, %v173
    %v178 = vsub.f32 %v170, %v174
    %v179 = vmul.f32 %v177, %v177
    %v180 = vmul.f32 %v178, %v178
    %v181 = vadd.f32 %v153, %v179
    %v182 = vadd.f32 %v154, %v180
    %v183 = vrsqrt.pop %v181
    %v184 = vmul.f32 %v183, %v181
    %v185 = vmul.f32 %v184, %v183
    %v186 = vmul.f32 0.5, %v185
    %v187 = vsub.f32 1.5, %v186
    %v188 = vmul.f32 %v183, %v187
    %v189 = vmul.f32 %v181, %v188
    %vm190 = vcmp.eq.f32.partialorder %v181, inf
    %v191 = vsel %vm190, %v181, %v189
    %vm192 = vcmp.eq.f32.partialorder %v181, 0.0
    %v193 = vand.u32 %v181, 2147483648
    %v194 = vsel %vm192, %v193, %v191
    %v195 = vrsqrt.pop %v182
    %v196 = vmul.f32 %v195, %v182
    %v197 = vmul.f32 %v196, %v195
    %v198 = vmul.f32 0.5, %v197
    %v199 = vsub.f32 1.5, %v198
    %v200 = vmul.f32 %v195, %v199
    %v201 = vmul.f32 %v182, %v200
    %vm202 = vcmp.eq.f32.partialorder %v182, inf
    %v203 = vsel %vm202, %v182, %v201
    %vm204 = vcmp.eq.f32.partialorder %v182, 0.0
    %v205 = vand.u32 %v182, 2147483648
    %v206 = vsel %vm204, %v205, %v203
    %v207 = vlaneseq
    %v208 = vshrl.u32 %v207, 7
    %v209 = vlaneseq
    %v210 = vand.u32 %v209, 127
    %vm211 = vcmp.ne.s32.totalorder %v208, %v210
    %v212 = vsel %vm211, 1, 0
    %v213 = vcvt.s32.f32 %v212
    %v214 = vperm.slane %v99, 0
    %v215 = vlaneseq
    %v216 = vshrl.u32 %v215, 7
    %218 = vset.pattern.permute.xlu0 %v216
    %219 = vperm.xlu0 %218, %v214
    %v220 = vpop.permute.xlu0 %219
    %v221 = vperm.slane %v99, 1
    %v222 = vlaneseq
    %v223 = vshrl.u32 %v222, 7
    %225 = vset.pattern.permute.xlu0 %v223
    %226 = vperm.xlu0 %225, %v221
    %v227 = vpop.permute.xlu0 %226
    %v229 = vrot.slane %v99, 1
    %v230 = vperm.slane %v99, 0
    %v231 = vperm.slane %v229, 0
    %v234 = vmul.f32 %v220, %v230
    %v235 = vmul.f32 %v227, %v231
    %vm236 = vcmp.le.f32.partialorder %v194, 6.0
    %vm237 = vcmp.le.f32.partialorder %v206, 6.0
    %v238 = vsel %vm236, 1, 0
    %v239 = vsel %vm237, 1, 0
    %v240 = vcvt.s32.f32 %v238
    %v241 = vcvt.s32.f32 %v239
    %v242 = vmul.f32 %v240, %v213
    %v243 = vmul.f32 %v241, %v213
    %v244 = vmul.f32 %v242, %v234
    %v245 = vmul.f32 %v243, %v235
    %v246 = vperm.slane %v244, 0
    %v247 = vlaneseq
    %v248 = vshrl.u32 %v247, 7
    %250 = vset.pattern.permute.xlu0 %v248
    %251 = vperm.xlu0 %250, %v246
    %v252 = vpop.permute.xlu0 %251
    %v253 = vperm.slane %v244, 1
    %v254 = vlaneseq
    %v255 = vshrl.u32 %v254, 7
    %257 = vset.pattern.permute.xlu0 %v255
    %258 = vperm.xlu0 %257, %v253
    %v259 = vpop.permute.xlu0 %258
    %v260 = vperm.slane %v244, 2
    %v261 = vlaneseq
    %v262 = vshrl.u32 %v261, 7
    %264 = vset.pattern.permute.xlu0 %v262
    %265 = vperm.xlu0 %264, %v260
    %v266 = vpop.permute.xlu0 %265
    %v267 = vperm.slane %v244, 3
    %v268 = vlaneseq
    %v269 = vshrl.u32 %v268, 7
    %271 = vset.pattern.permute.xlu0 %v269
    %272 = vperm.xlu0 %271, %v267
    %v273 = vpop.permute.xlu0 %272
    %v274 = vperm.slane %v244, 4
    %v275 = vlaneseq
    %v276 = vshrl.u32 %v275, 7
    %278 = vset.pattern.permute.xlu0 %v276
    %279 = vperm.xlu0 %278, %v274
    %v280 = vpop.permute.xlu0 %279
    %v281 = vperm.slane %v244, 5
    %v282 = vlaneseq
    %v283 = vshrl.u32 %v282, 7
    %285 = vset.pattern.permute.xlu0 %v283
    %286 = vperm.xlu0 %285, %v281
    %v287 = vpop.permute.xlu0 %286
    %v288 = vperm.slane %v244, 6
    %v289 = vlaneseq
    %v290 = vshrl.u32 %v289, 7
    %292 = vset.pattern.permute.xlu0 %v290
    %293 = vperm.xlu0 %292, %v288
    %v294 = vpop.permute.xlu0 %293
    %v295 = vperm.slane %v244, 7
    %v296 = vlaneseq
    %v297 = vshrl.u32 %v296, 7
    %299 = vset.pattern.permute.xlu0 %v297
    %300 = vperm.xlu0 %299, %v295
    %v301 = vpop.permute.xlu0 %300
    %v302 = vperm.slane %v245, 0
    %v303 = vlaneseq
    %v304 = vshrl.u32 %v303, 7
    %306 = vset.pattern.permute.xlu0 %v304
    %307 = vperm.xlu0 %306, %v302
    %v308 = vpop.permute.xlu0 %307
    %v309 = vperm.slane %v245, 1
    %v310 = vlaneseq
    %v311 = vshrl.u32 %v310, 7
    %313 = vset.pattern.permute.xlu0 %v311
    %314 = vperm.xlu0 %313, %v309
    %v315 = vpop.permute.xlu0 %314
    %v316 = vperm.slane %v245, 2
    %v317 = vlaneseq
    %v318 = vshrl.u32 %v317, 7
    %320 = vset.pattern.permute.xlu0 %v318
    %321 = vperm.xlu0 %320, %v316
    %v322 = vpop.permute.xlu0 %321
    %v323 = vperm.slane %v245, 3
    %v324 = vlaneseq
    %v325 = vshrl.u32 %v324, 7
    %327 = vset.pattern.permute.xlu0 %v325
    %328 = vperm.xlu0 %327, %v323
    %v329 = vpop.permute.xlu0 %328
    %v330 = vperm.slane %v245, 4
    %v331 = vlaneseq
    %v332 = vshrl.u32 %v331, 7
    %334 = vset.pattern.permute.xlu0 %v332
    %335 = vperm.xlu0 %334, %v330
    %v336 = vpop.permute.xlu0 %335
    %v337 = vperm.slane %v245, 5
    %v338 = vlaneseq
    %v339 = vshrl.u32 %v338, 7
    %341 = vset.pattern.permute.xlu0 %v339
    %342 = vperm.xlu0 %341, %v337
    %v343 = vpop.permute.xlu0 %342
    %v344 = vperm.slane %v245, 6
    %v345 = vlaneseq
    %v346 = vshrl.u32 %v345, 7
    %348 = vset.pattern.permute.xlu0 %v346
    %349 = vperm.xlu0 %348, %v344
    %v350 = vpop.permute.xlu0 %349
    %v351 = vperm.slane %v245, 7
    %v352 = vlaneseq
    %v353 = vshrl.u32 %v352, 7
    %355 = vset.pattern.permute.xlu0 %v353
    %356 = vperm.xlu0 %355, %v351
    %v357 = vpop.permute.xlu0 %356
    %v358 = vperm.slane %v194, 0
    %v359 = vlaneseq
    %v360 = vshrl.u32 %v359, 7
    %362 = vset.pattern.permute.xlu0 %v360
    %363 = vperm.xlu0 %362, %v358
    %v364 = vpop.permute.xlu0 %363
    %v365 = vperm.slane %v194, 1
    %v366 = vlaneseq
    %v367 = vshrl.u32 %v366, 7
    %369 = vset.pattern.permute.xlu0 %v367
    %370 = vperm.xlu0 %369, %v365
    %v371 = vpop.permute.xlu0 %370
    %v372 = vperm.slane %v194, 2
    %v373 = vlaneseq
    %v374 = vshrl.u32 %v373, 7
    %376 = vset.pattern.permute.xlu0 %v374
    %377 = vperm.xlu0 %376, %v372
    %v378 = vpop.permute.xlu0 %377
    %v379 = vperm.slane %v194, 3
    %v380 = vlaneseq
    %v381 = vshrl.u32 %v380, 7
    %383 = vset.pattern.permute.xlu0 %v381
    %384 = vperm.xlu0 %383, %v379
    %v385 = vpop.permute.xlu0 %384
    %v386 = vperm.slane %v194, 4
    %v387 = vlaneseq
    %v388 = vshrl.u32 %v387, 7
    %390 = vset.pattern.permute.xlu0 %v388
    %391 = vperm.xlu0 %390, %v386
    %v392 = vpop.permute.xlu0 %391
    %v393 = vperm.slane %v194, 5
    %v394 = vlaneseq
    %v395 = vshrl.u32 %v394, 7
    %397 = vset.pattern.permute.xlu0 %v395
    %398 = vperm.xlu0 %397, %v393
    %v399 = vpop.permute.xlu0 %398
    %v400 = vperm.slane %v194, 6
    %v401 = vlaneseq
    %v402 = vshrl.u32 %v401, 7
    %404 = vset.pattern.permute.xlu0 %v402
    %405 = vperm.xlu0 %404, %v400
    %v406 = vpop.permute.xlu0 %405
    %v407 = vperm.slane %v194, 7
    %v408 = vlaneseq
    %v409 = vshrl.u32 %v408, 7
    %411 = vset.pattern.permute.xlu0 %v409
    %412 = vperm.xlu0 %411, %v407
    %v413 = vpop.permute.xlu0 %412
    %v414 = vperm.slane %v206, 0
    %v415 = vlaneseq
    %v416 = vshrl.u32 %v415, 7
    %418 = vset.pattern.permute.xlu0 %v416
    %419 = vperm.xlu0 %418, %v414
    %v420 = vpop.permute.xlu0 %419
    %v421 = vperm.slane %v206, 1
    %v422 = vlaneseq
    %v423 = vshrl.u32 %v422, 7
    %425 = vset.pattern.permute.xlu0 %v423
    %426 = vperm.xlu0 %425, %v421
    %v427 = vpop.permute.xlu0 %426
    %v428 = vperm.slane %v206, 2
    %v429 = vlaneseq
    %v430 = vshrl.u32 %v429, 7
    %432 = vset.pattern.permute.xlu0 %v430
    %433 = vperm.xlu0 %432, %v428
    %v434 = vpop.permute.xlu0 %433
    %v435 = vperm.slane %v206, 3
    %v436 = vlaneseq
    %v437 = vshrl.u32 %v436, 7
    %439 = vset.pattern.permute.xlu0 %v437
    %440 = vperm.xlu0 %439, %v435
    %v441 = vpop.permute.xlu0 %440
    %v442 = vperm.slane %v206, 4
    %v443 = vlaneseq
    %v444 = vshrl.u32 %v443, 7
    %446 = vset.pattern.permute.xlu0 %v444
    %447 = vperm.xlu0 %446, %v442
    %v448 = vpop.permute.xlu0 %447
    %v449 = vperm.slane %v206, 5
    %v450 = vlaneseq
    %v451 = vshrl.u32 %v450, 7
    %453 = vset.pattern.permute.xlu0 %v451
    %454 = vperm.xlu0 %453, %v449
    %v455 = vpop.permute.xlu0 %454
    %v456 = vperm.slane %v206, 6
    %v457 = vlaneseq
    %v458 = vshrl.u32 %v457, 7
    %460 = vset.pattern.permute.xlu0 %v458
    %461 = vperm.xlu0 %460, %v456
    %v462 = vpop.permute.xlu0 %461
    %v463 = vperm.slane %v206, 7
    %v464 = vlaneseq
    %v465 = vshrl.u32 %v464, 7
    %467 = vset.pattern.permute.xlu0 %v465
    %468 = vperm.xlu0 %467, %v463
    %v469 = vpop.permute.xlu0 %468
    %v470 = vld [vmem:[#allocation8] sm:$0xff]
    %v471 = vld [vmem:[#allocation8 + $0x8] sm:$0xff]
    %v472 = vld [vmem:[#allocation8 + $0x10] sm:$0xff]
    %v473 = vld [vmem:[#allocation8 + $0x18] sm:$0xff]
    %s474 = scalar_lea.vmem [#allocation8], 32
    %v475 = vld [vmem:[%s474] sm:$0xff]
    %v476 = vld [vmem:[%s474 + $0x8] sm:$0xff]
    %v477 = vld [vmem:[%s474 + $0x10] sm:$0xff]
    %v478 = vld [vmem:[%s474 + $0x18] sm:$0xff]
    %v479 = vld [vmem:[#allocation10] sm:$0x1]
    %s480 = scalar_lea.vmem [#allocation10], 1
    %v481 = vld [vmem:[%s480] sm:$0x1]
    %s482 = scalar_lea.vmem [#allocation10], 2
    %v483 = vld [vmem:[%s482] sm:$0x1]
    %vm484 = vcmask 261120
    %v486 = vsel %vm484, %v97, 0
    %v489 = vsel %vm484, %v98, 0
    %491 = vmatpush.msra.mxu0 0.0
    %492 = vmatpush.msra.mxu0 0.0
    %493 = vmatpush.msra.mxu0 0.0
    %494 = vmatpush.msra.mxu0 0.0
    %495 = vmatpush.msra.mxu0 0.0
    %496 = vmatpush.msra.mxu0 0.0
    %497 = vmatpush.msra.mxu0 0.0
    %498 = vmatpush.msra.mxu0 0.0
    %499 = vmatpush.msra.mxu0 0.0
    %500 = vmatpush.msra.mxu0 0.0
    %501 = vmatpush.msra.mxu0 0.0
    %502 = vmatpush.msra.mxu0 0.0
    %503 = vmatpush.msra.mxu0 %v473
    %504 = vmatpush.msra.mxu0 %v472
    %505 = vmatpush.msra.mxu0 %v471
    %506 = vmatpush.msra.mxu0 %v470
    %507 = vmatmul.f32.gmra.mxu0 %v486
    %v508 = vpop.f32.mrf.mxu0
    %v509 = vadd.f32 0.0, %v508
    %510 = vmatmul.f32.gmra.mxu0 %v489
    %v511 = vpop.f32.mrf.mxu0
    %v512 = vadd.f32 0.0, %v511
    %513 = vdwg.mxu0
    %v515 = vperm.slane %v479, 0
    %v517 = vmul.f32 %v364, %v515
    %v518 = vmul.f32 %v371, %v515
    %v519 = vmul.f32 %v378, %v515
    %v520 = vmul.f32 %v385, %v515
    %v521 = vmul.f32 %v392, %v515
    %v522 = vmul.f32 %v399, %v515
    %v523 = vmul.f32 %v406, %v515
    %v524 = vmul.f32 %v413, %v515
    %v525 = vmul.f32 %v420, %v515
    %v526 = vmul.f32 %v427, %v515
    %v527 = vmul.f32 %v434, %v515
    %v528 = vmul.f32 %v441, %v515
    %v529 = vmul.f32 %v448, %v515
    %v530 = vmul.f32 %v455, %v515
    %v531 = vmul.f32 %v462, %v515
    %v532 = vmul.f32 %v469, %v515
    %v533 = vadd.f32 %v509, %v517
    %v534 = vadd.f32 %v509, %v518
    %v535 = vadd.f32 %v509, %v519
    %v536 = vadd.f32 %v509, %v520
    %v537 = vadd.f32 %v509, %v521
    %v538 = vadd.f32 %v509, %v522
    %v539 = vadd.f32 %v509, %v523
    %v540 = vadd.f32 %v509, %v524
    %v541 = vadd.f32 %v512, %v525
    %v542 = vadd.f32 %v512, %v526
    %v543 = vadd.f32 %v512, %v527
    %v544 = vadd.f32 %v512, %v528
    %v545 = vadd.f32 %v512, %v529
    %v546 = vadd.f32 %v512, %v530
    %v547 = vadd.f32 %v512, %v531
    %v548 = vadd.f32 %v512, %v532
    %v550 = vperm.slane %v481, 0
    %v552 = vadd.f32 %v533, %v550
    %v553 = vadd.f32 %v534, %v550
    %v554 = vadd.f32 %v535, %v550
    %v555 = vadd.f32 %v536, %v550
    %v556 = vadd.f32 %v537, %v550
    %v557 = vadd.f32 %v538, %v550
    %v558 = vadd.f32 %v539, %v550
    %v559 = vadd.f32 %v540, %v550
    %v560 = vadd.f32 %v541, %v550
    %v561 = vadd.f32 %v542, %v550
    %v562 = vadd.f32 %v543, %v550
    %v563 = vadd.f32 %v544, %v550
    %v564 = vadd.f32 %v545, %v550
    %v565 = vadd.f32 %v546, %v550
    %v566 = vadd.f32 %v547, %v550
    %v567 = vadd.f32 %v548, %v550
    %v568 = vmax.f32 %v552, 0.0
    %v569 = vmax.f32 %v553, 0.0
    %v570 = vmax.f32 %v554, 0.0
    %v571 = vmax.f32 %v555, 0.0
    %v572 = vmax.f32 %v556, 0.0
    %v573 = vmax.f32 %v557, 0.0
    %v574 = vmax.f32 %v558, 0.0
    %v575 = vmax.f32 %v559, 0.0
    %v576 = vmax.f32 %v560, 0.0
    %v577 = vmax.f32 %v561, 0.0
    %v578 = vmax.f32 %v562, 0.0
    %v579 = vmax.f32 %v563, 0.0
    %v580 = vmax.f32 %v564, 0.0
    %v581 = vmax.f32 %v565, 0.0
    %v582 = vmax.f32 %v566, 0.0
    %v583 = vmax.f32 %v567, 0.0
    %v585 = vperm.slane %v483, 0
    %v588 = vsel %vm484, %v568, 0
    %v591 = vsel %vm484, %v569, 0
    %v594 = vsel %vm484, %v570, 0
    %v597 = vsel %vm484, %v571, 0
    %v600 = vsel %vm484, %v572, 0
    %v603 = vsel %vm484, %v573, 0
    %v606 = vsel %vm484, %v574, 0
    %v609 = vsel %vm484, %v575, 0
    %v612 = vsel %vm484, %v576, 0
    %v615 = vsel %vm484, %v577, 0
    %v618 = vsel %vm484, %v578, 0
    %v621 = vsel %vm484, %v579, 0
    %v624 = vsel %vm484, %v580, 0
    %v627 = vsel %vm484, %v581, 0
    %v630 = vsel %vm484, %v582, 0
    %v633 = vsel %vm484, %v583, 0
    %635 = vmatpush.msra.mxu0 0.0
    %636 = vmatpush.msra.mxu0 0.0
    %637 = vmatpush.msra.mxu0 0.0
    %638 = vmatpush.msra.mxu0 0.0
    %639 = vmatpush.msra.mxu0 0.0
    %640 = vmatpush.msra.mxu0 0.0
    %641 = vmatpush.msra.mxu0 0.0
    %642 = vmatpush.msra.mxu0 0.0
    %643 = vmatpush.msra.mxu0 0.0
    %644 = vmatpush.msra.mxu0 0.0
    %645 = vmatpush.msra.mxu0 0.0
    %646 = vmatpush.msra.mxu0 0.0
    %647 = vmatpush.msra.mxu0 %v478
    %648 = vmatpush.msra.mxu0 %v477
    %649 = vmatpush.msra.mxu0 %v476
    %650 = vmatpush.msra.mxu0 %v475
    %651 = vmatmul.f32.gmra.mxu0 %v588
    %v652 = vpop.f32.mrf.mxu0
    %v653 = vadd.f32 %v585, %v652
    %654 = vmatmul.f32.gmra.mxu0 %v591
    %v655 = vpop.f32.mrf.mxu0
    %v656 = vadd.f32 %v585, %v655
    %657 = vmatmul.f32.gmra.mxu0 %v594
    %v658 = vpop.f32.mrf.mxu0
    %v659 = vadd.f32 %v585, %v658
    %660 = vmatmul.f32.gmra.mxu0 %v597
    %v661 = vpop.f32.mrf.mxu0
    %v662 = vadd.f32 %v585, %v661
    %663 = vmatmul.f32.gmra.mxu0 %v600
    %v664 = vpop.f32.mrf.mxu0
    %v665 = vadd.f32 %v585, %v664
    %666 = vmatmul.f32.gmra.mxu0 %v603
    %v667 = vpop.f32.mrf.mxu0
    %v668 = vadd.f32 %v585, %v667
    %669 = vmatmul.f32.gmra.mxu0 %v606
    %v670 = vpop.f32.mrf.mxu0
    %v671 = vadd.f32 %v585, %v670
    %672 = vmatmul.f32.gmra.mxu0 %v609
    %v673 = vpop.f32.mrf.mxu0
    %v674 = vadd.f32 %v585, %v673
    %675 = vmatmul.f32.gmra.mxu0 %v612
    %v676 = vpop.f32.mrf.mxu0
    %v677 = vadd.f32 %v585, %v676
    %678 = vmatmul.f32.gmra.mxu0 %v615
    %v679 = vpop.f32.mrf.mxu0
    %v680 = vadd.f32 %v585, %v679
    %681 = vmatmul.f32.gmra.mxu0 %v618
    %v682 = vpop.f32.mrf.mxu0
    %v683 = vadd.f32 %v585, %v682
    %684 = vmatmul.f32.gmra.mxu0 %v621
    %v685 = vpop.f32.mrf.mxu0
    %v686 = vadd.f32 %v585, %v685
    %687 = vmatmul.f32.gmra.mxu0 %v624
    %v688 = vpop.f32.mrf.mxu0
    %v689 = vadd.f32 %v585, %v688
    %690 = vmatmul.f32.gmra.mxu0 %v627
    %v691 = vpop.f32.mrf.mxu0
    %v692 = vadd.f32 %v585, %v691
    %693 = vmatmul.f32.gmra.mxu0 %v630
    %v694 = vpop.f32.mrf.mxu0
    %v695 = vadd.f32 %v585, %v694
    %696 = vmatmul.f32.gmra.mxu0 %v633
    %v697 = vpop.f32.mrf.mxu0
    %v698 = vadd.f32 %v585, %v697
    %699 = vdwg.mxu0
    %v700 = vmul.f32 %v252, %v653
    %v701 = vmul.f32 %v259, %v656
    %v702 = vmul.f32 %v266, %v659
    %v703 = vmul.f32 %v273, %v662
    %v704 = vmul.f32 %v280, %v665
    %v705 = vmul.f32 %v287, %v668
    %v706 = vmul.f32 %v294, %v671
    %v707 = vmul.f32 %v301, %v674
    %v708 = vmul.f32 %v308, %v677
    %v709 = vmul.f32 %v315, %v680
    %v710 = vmul.f32 %v322, %v683
    %v711 = vmul.f32 %v329, %v686
    %v712 = vmul.f32 %v336, %v689
    %v713 = vmul.f32 %v343, %v692
    %v714 = vmul.f32 %v350, %v695
    %v715 = vmul.f32 %v357, %v698
    %v716 = vsel %vm484, %v700, 0.0
    %v717 = vrot.slane %v716, 4
    %v718 = vadd.f32 %v716, %v717
    %v719 = vrot.slane %v718, 2
    %v720 = vadd.f32 %v718, %v719
    %v721 = vrot.slane %v720, 1
    %v722 = vadd.f32 %v720, %v721
    %v723 = vsel %vm484, %v701, 0.0
    %v724 = vrot.slane %v723, 4
    %v725 = vadd.f32 %v723, %v724
    %v726 = vrot.slane %v725, 2
    %v727 = vadd.f32 %v725, %v726
    %v728 = vrot.slane %v727, 1
    %v729 = vadd.f32 %v727, %v728
    %v730 = vsel %vm484, %v702, 0.0
    %v731 = vrot.slane %v730, 4
    %v732 = vadd.f32 %v730, %v731
    %v733 = vrot.slane %v732, 2
    %v734 = vadd.f32 %v732, %v733
    %v735 = vrot.slane %v734, 1
    %v736 = vadd.f32 %v734, %v735
    %v737 = vsel %vm484, %v703, 0.0
    %v738 = vrot.slane %v737, 4
    %v739 = vadd.f32 %v737, %v738
    %v740 = vrot.slane %v739, 2
    %v741 = vadd.f32 %v739, %v740
    %v742 = vrot.slane %v741, 1
    %v743 = vadd.f32 %v741, %v742
    %v744 = vsel %vm484, %v704, 0.0
    %v745 = vrot.slane %v744, 4
    %v746 = vadd.f32 %v744, %v745
    %v747 = vrot.slane %v746, 2
    %v748 = vadd.f32 %v746, %v747
    %v749 = vrot.slane %v748, 1
    %v750 = vadd.f32 %v748, %v749
    %v751 = vsel %vm484, %v705, 0.0
    %v752 = vrot.slane %v751, 4
    %v753 = vadd.f32 %v751, %v752
    %v754 = vrot.slane %v753, 2
    %v755 = vadd.f32 %v753, %v754
    %v756 = vrot.slane %v755, 1
    %v757 = vadd.f32 %v755, %v756
    %v758 = vsel %vm484, %v706, 0.0
    %v759 = vrot.slane %v758, 4
    %v760 = vadd.f32 %v758, %v759
    %v761 = vrot.slane %v760, 2
    %v762 = vadd.f32 %v760, %v761
    %v763 = vrot.slane %v762, 1
    %v764 = vadd.f32 %v762, %v763
    %v765 = vsel %vm484, %v707, 0.0
    %v766 = vrot.slane %v765, 4
    %v767 = vadd.f32 %v765, %v766
    %v768 = vrot.slane %v767, 2
    %v769 = vadd.f32 %v767, %v768
    %v770 = vrot.slane %v769, 1
    %v771 = vadd.f32 %v769, %v770
    %v772 = vsel %vm484, %v708, 0.0
    %v773 = vrot.slane %v772, 4
    %v774 = vadd.f32 %v772, %v773
    %v775 = vrot.slane %v774, 2
    %v776 = vadd.f32 %v774, %v775
    %v777 = vrot.slane %v776, 1
    %v778 = vadd.f32 %v776, %v777
    %v779 = vsel %vm484, %v709, 0.0
    %v780 = vrot.slane %v779, 4
    %v781 = vadd.f32 %v779, %v780
    %v782 = vrot.slane %v781, 2
    %v783 = vadd.f32 %v781, %v782
    %v784 = vrot.slane %v783, 1
    %v785 = vadd.f32 %v783, %v784
    %v786 = vsel %vm484, %v710, 0.0
    %v787 = vrot.slane %v786, 4
    %v788 = vadd.f32 %v786, %v787
    %v789 = vrot.slane %v788, 2
    %v790 = vadd.f32 %v788, %v789
    %v791 = vrot.slane %v790, 1
    %v792 = vadd.f32 %v790, %v791
    %v793 = vsel %vm484, %v711, 0.0
    %v794 = vrot.slane %v793, 4
    %v795 = vadd.f32 %v793, %v794
    %v796 = vrot.slane %v795, 2
    %v797 = vadd.f32 %v795, %v796
    %v798 = vrot.slane %v797, 1
    %v799 = vadd.f32 %v797, %v798
    %v800 = vsel %vm484, %v712, 0.0
    %v801 = vrot.slane %v800, 4
    %v802 = vadd.f32 %v800, %v801
    %v803 = vrot.slane %v802, 2
    %v804 = vadd.f32 %v802, %v803
    %v805 = vrot.slane %v804, 1
    %v806 = vadd.f32 %v804, %v805
    %v807 = vsel %vm484, %v713, 0.0
    %v808 = vrot.slane %v807, 4
    %v809 = vadd.f32 %v807, %v808
    %v810 = vrot.slane %v809, 2
    %v811 = vadd.f32 %v809, %v810
    %v812 = vrot.slane %v811, 1
    %v813 = vadd.f32 %v811, %v812
    %v814 = vsel %vm484, %v714, 0.0
    %v815 = vrot.slane %v814, 4
    %v816 = vadd.f32 %v814, %v815
    %v817 = vrot.slane %v816, 2
    %v818 = vadd.f32 %v816, %v817
    %v819 = vrot.slane %v818, 1
    %v820 = vadd.f32 %v818, %v819
    %v821 = vsel %vm484, %v715, 0.0
    %v822 = vrot.slane %v821, 4
    %v823 = vadd.f32 %v821, %v822
    %v824 = vrot.slane %v823, 2
    %v825 = vadd.f32 %v823, %v824
    %v826 = vrot.slane %v825, 1
    %v827 = vadd.f32 %v825, %v826
    %vm844 = vcmask 1041409
    %v845 = vsel %vm844, %v729, %v722
    %vm846 = vcmask 1042434
    %v847 = vsel %vm846, %v736, %v845
    %vm848 = vcmask 1043459
    %v849 = vsel %vm848, %v743, %v847
    %vm850 = vcmask 1044484
    %v851 = vsel %vm850, %v750, %v849
    %vm852 = vcmask 1045509
    %v853 = vsel %vm852, %v757, %v851
    %vm854 = vcmask 1046534
    %v855 = vsel %vm854, %v764, %v853
    %vm856 = vcmask 1047559
    %v857 = vsel %vm856, %v771, %v855
    %v858 = vsel %vm844, %v785, %v778
    %v859 = vsel %vm846, %v792, %v858
    %v860 = vsel %vm848, %v799, %v859
    %v861 = vsel %vm850, %v806, %v860
    %v862 = vsel %vm852, %v813, %v861
    %v863 = vsel %vm854, %v820, %v862
    %v864 = vsel %vm856, %v827, %v863
    %v867 = vadd.f32 %v97, %v857
    %v868 = vadd.f32 %v98, %v864
    %s869 = scalar_lea.vmem [#allocation8], 64
    %v870 = vld [vmem:[%s869] sm:$0xff]
    %v871 = vld [vmem:[%s869 + $0x8] sm:$0xff]
    %v872 = vld [vmem:[%s869 + $0x10] sm:$0xff]
    %v873 = vld [vmem:[%s869 + $0x18] sm:$0xff]
    %s874 = scalar_lea.vmem [#allocation8], 96
    %v875 = vld [vmem:[%s874] sm:$0xff]
    %v876 = vld [vmem:[%s874 + $0x8] sm:$0xff]
    %v877 = vld [vmem:[%s874 + $0x10] sm:$0xff]
    %v878 = vld [vmem:[%s874 + $0x18] sm:$0xff]
    %s879 = scalar_lea.vmem [#allocation10], 3
    %v880 = vld [vmem:[%s879] sm:$0x1]
    %s881 = scalar_lea.vmem [#allocation10], 4
    %v882 = vld [vmem:[%s881] sm:$0x1]
    %s883 = scalar_lea.vmem [#allocation10], 5
    %v884 = vld [vmem:[%s883] sm:$0x1]
    %v886 = vsel %vm484, %v867, 0
    %v889 = vsel %vm484, %v868, 0
    %891 = vmatpush.msra.mxu0 0.0
    %892 = vmatpush.msra.mxu0 0.0
    %893 = vmatpush.msra.mxu0 0.0
    %894 = vmatpush.msra.mxu0 0.0
    %895 = vmatpush.msra.mxu0 0.0
    %896 = vmatpush.msra.mxu0 0.0
    %897 = vmatpush.msra.mxu0 0.0
    %898 = vmatpush.msra.mxu0 0.0
    %899 = vmatpush.msra.mxu0 0.0
    %900 = vmatpush.msra.mxu0 0.0
    %901 = vmatpush.msra.mxu0 0.0
    %902 = vmatpush.msra.mxu0 0.0
    %903 = vmatpush.msra.mxu0 %v873
    %904 = vmatpush.msra.mxu0 %v872
    %905 = vmatpush.msra.mxu0 %v871
    %906 = vmatpush.msra.mxu0 %v870
    %907 = vmatmul.f32.gmra.mxu0 %v886
    %v908 = vpop.f32.mrf.mxu0
    %v909 = vadd.f32 0.0, %v908
    %910 = vmatmul.f32.gmra.mxu0 %v889
    %v911 = vpop.f32.mrf.mxu0
    %v912 = vadd.f32 0.0, %v911
    %913 = vdwg.mxu0
    %v915 = vperm.slane %v880, 0
    %v917 = vmul.f32 %v364, %v915
    %v918 = vmul.f32 %v371, %v915
    %v919 = vmul.f32 %v378, %v915
    %v920 = vmul.f32 %v385, %v915
    %v921 = vmul.f32 %v392, %v915
    %v922 = vmul.f32 %v399, %v915
    %v923 = vmul.f32 %v406, %v915
    %v924 = vmul.f32 %v413, %v915
    %v925 = vmul.f32 %v420, %v915
    %v926 = vmul.f32 %v427, %v915
    %v927 = vmul.f32 %v434, %v915
    %v928 = vmul.f32 %v441, %v915
    %v929 = vmul.f32 %v448, %v915
    %v930 = vmul.f32 %v455, %v915
    %v931 = vmul.f32 %v462, %v915
    %v932 = vmul.f32 %v469, %v915
    %v933 = vadd.f32 %v909, %v917
    %v934 = vadd.f32 %v909, %v918
    %v935 = vadd.f32 %v909, %v919
    %v936 = vadd.f32 %v909, %v920
    %v937 = vadd.f32 %v909, %v921
    %v938 = vadd.f32 %v909, %v922
    %v939 = vadd.f32 %v909, %v923
    %v940 = vadd.f32 %v909, %v924
    %v941 = vadd.f32 %v912, %v925
    %v942 = vadd.f32 %v912, %v926
    %v943 = vadd.f32 %v912, %v927
    %v944 = vadd.f32 %v912, %v928
    %v945 = vadd.f32 %v912, %v929
    %v946 = vadd.f32 %v912, %v930
    %v947 = vadd.f32 %v912, %v931
    %v948 = vadd.f32 %v912, %v932
    %v950 = vperm.slane %v882, 0
    %v952 = vadd.f32 %v933, %v950
    %v953 = vadd.f32 %v934, %v950
    %v954 = vadd.f32 %v935, %v950
    %v955 = vadd.f32 %v936, %v950
    %v956 = vadd.f32 %v937, %v950
    %v957 = vadd.f32 %v938, %v950
    %v958 = vadd.f32 %v939, %v950
    %v959 = vadd.f32 %v940, %v950
    %v960 = vadd.f32 %v941, %v950
    %v961 = vadd.f32 %v942, %v950
    %v962 = vadd.f32 %v943, %v950
    %v963 = vadd.f32 %v944, %v950
    %v964 = vadd.f32 %v945, %v950
    %v965 = vadd.f32 %v946, %v950
    %v966 = vadd.f32 %v947, %v950
    %v967 = vadd.f32 %v948, %v950
    %v968 = vmax.f32 %v952, 0.0
    %v969 = vmax.f32 %v953, 0.0
    %v970 = vmax.f32 %v954, 0.0
    %v971 = vmax.f32 %v955, 0.0
    %v972 = vmax.f32 %v956, 0.0
    %v973 = vmax.f32 %v957, 0.0
    %v974 = vmax.f32 %v958, 0.0
    %v975 = vmax.f32 %v959, 0.0
    %v976 = vmax.f32 %v960, 0.0
    %v977 = vmax.f32 %v961, 0.0
    %v978 = vmax.f32 %v962, 0.0
    %v979 = vmax.f32 %v963, 0.0
    %v980 = vmax.f32 %v964, 0.0
    %v981 = vmax.f32 %v965, 0.0
    %v982 = vmax.f32 %v966, 0.0
    %v983 = vmax.f32 %v967, 0.0
    %v985 = vperm.slane %v884, 0
    %v988 = vsel %vm484, %v968, 0
    %v991 = vsel %vm484, %v969, 0
    %v994 = vsel %vm484, %v970, 0
    %v997 = vsel %vm484, %v971, 0
    %v1000 = vsel %vm484, %v972, 0
    %v1003 = vsel %vm484, %v973, 0
    %v1006 = vsel %vm484, %v974, 0
    %v1009 = vsel %vm484, %v975, 0
    %v1012 = vsel %vm484, %v976, 0
    %v1015 = vsel %vm484, %v977, 0
    %v1018 = vsel %vm484, %v978, 0
    %v1021 = vsel %vm484, %v979, 0
    %v1024 = vsel %vm484, %v980, 0
    %v1027 = vsel %vm484, %v981, 0
    %v1030 = vsel %vm484, %v982, 0
    %v1033 = vsel %vm484, %v983, 0
    %1035 = vmatpush.msra.mxu0 0.0
    %1036 = vmatpush.msra.mxu0 0.0
    %1037 = vmatpush.msra.mxu0 0.0
    %1038 = vmatpush.msra.mxu0 0.0
    %1039 = vmatpush.msra.mxu0 0.0
    %1040 = vmatpush.msra.mxu0 0.0
    %1041 = vmatpush.msra.mxu0 0.0
    %1042 = vmatpush.msra.mxu0 0.0
    %1043 = vmatpush.msra.mxu0 0.0
    %1044 = vmatpush.msra.mxu0 0.0
    %1045 = vmatpush.msra.mxu0 0.0
    %1046 = vmatpush.msra.mxu0 0.0
    %1047 = vmatpush.msra.mxu0 %v878
    %1048 = vmatpush.msra.mxu0 %v877
    %1049 = vmatpush.msra.mxu0 %v876
    %1050 = vmatpush.msra.mxu0 %v875
    %1051 = vmatmul.f32.gmra.mxu0 %v988
    %v1052 = vpop.f32.mrf.mxu0
    %v1053 = vadd.f32 %v985, %v1052
    %1054 = vmatmul.f32.gmra.mxu0 %v991
    %v1055 = vpop.f32.mrf.mxu0
    %v1056 = vadd.f32 %v985, %v1055
    %1057 = vmatmul.f32.gmra.mxu0 %v994
    %v1058 = vpop.f32.mrf.mxu0
    %v1059 = vadd.f32 %v985, %v1058
    %1060 = vmatmul.f32.gmra.mxu0 %v997
    %v1061 = vpop.f32.mrf.mxu0
    %v1062 = vadd.f32 %v985, %v1061
    %1063 = vmatmul.f32.gmra.mxu0 %v1000
    %v1064 = vpop.f32.mrf.mxu0
    %v1065 = vadd.f32 %v985, %v1064
    %1066 = vmatmul.f32.gmra.mxu0 %v1003
    %v1067 = vpop.f32.mrf.mxu0
    %v1068 = vadd.f32 %v985, %v1067
    %1069 = vmatmul.f32.gmra.mxu0 %v1006
    %v1070 = vpop.f32.mrf.mxu0
    %v1071 = vadd.f32 %v985, %v1070
    %1072 = vmatmul.f32.gmra.mxu0 %v1009
    %v1073 = vpop.f32.mrf.mxu0
    %v1074 = vadd.f32 %v985, %v1073
    %1075 = vmatmul.f32.gmra.mxu0 %v1012
    %v1076 = vpop.f32.mrf.mxu0
    %v1077 = vadd.f32 %v985, %v1076
    %1078 = vmatmul.f32.gmra.mxu0 %v1015
    %v1079 = vpop.f32.mrf.mxu0
    %v1080 = vadd.f32 %v985, %v1079
    %1081 = vmatmul.f32.gmra.mxu0 %v1018
    %v1082 = vpop.f32.mrf.mxu0
    %v1083 = vadd.f32 %v985, %v1082
    %1084 = vmatmul.f32.gmra.mxu0 %v1021
    %v1085 = vpop.f32.mrf.mxu0
    %v1086 = vadd.f32 %v985, %v1085
    %1087 = vmatmul.f32.gmra.mxu0 %v1024
    %v1088 = vpop.f32.mrf.mxu0
    %v1089 = vadd.f32 %v985, %v1088
    %1090 = vmatmul.f32.gmra.mxu0 %v1027
    %v1091 = vpop.f32.mrf.mxu0
    %v1092 = vadd.f32 %v985, %v1091
    %1093 = vmatmul.f32.gmra.mxu0 %v1030
    %v1094 = vpop.f32.mrf.mxu0
    %v1095 = vadd.f32 %v985, %v1094
    %1096 = vmatmul.f32.gmra.mxu0 %v1033
    %v1097 = vpop.f32.mrf.mxu0
    %v1098 = vadd.f32 %v985, %v1097
    %1099 = vdwg.mxu0
    %v1100 = vmul.f32 %v252, %v1053
    %v1101 = vmul.f32 %v259, %v1056
    %v1102 = vmul.f32 %v266, %v1059
    %v1103 = vmul.f32 %v273, %v1062
    %v1104 = vmul.f32 %v280, %v1065
    %v1105 = vmul.f32 %v287, %v1068
    %v1106 = vmul.f32 %v294, %v1071
    %v1107 = vmul.f32 %v301, %v1074
    %v1108 = vmul.f32 %v308, %v1077
    %v1109 = vmul.f32 %v315, %v1080
    %v1110 = vmul.f32 %v322, %v1083
    %v1111 = vmul.f32 %v329, %v1086
    %v1112 = vmul.f32 %v336, %v1089
    %v1113 = vmul.f32 %v343, %v1092
    %v1114 = vmul.f32 %v350, %v1095
    %v1115 = vmul.f32 %v357, %v1098
    %v1116 = vsel %vm484, %v1100, 0.0
    %v1117 = vrot.slane %v1116, 4
    %v1118 = vadd.f32 %v1116, %v1117
    %v1119 = vrot.slane %v1118, 2
    %v1120 = vadd.f32 %v1118, %v1119
    %v1121 = vrot.slane %v1120, 1
    %v1122 = vadd.f32 %v1120, %v1121
    %v1123 = vsel %vm484, %v1101, 0.0
    %v1124 = vrot.slane %v1123, 4
    %v1125 = vadd.f32 %v1123, %v1124
    %v1126 = vrot.slane %v1125, 2
    %v1127 = vadd.f32 %v1125, %v1126
    %v1128 = vrot.slane %v1127, 1
    %v1129 = vadd.f32 %v1127, %v1128
    %v1130 = vsel %vm484, %v1102, 0.0
    %v1131 = vrot.slane %v1130, 4
    %v1132 = vadd.f32 %v1130, %v1131
    %v1133 = vrot.slane %v1132, 2
    %v1134 = vadd.f32 %v1132, %v1133
    %v1135 = vrot.slane %v1134, 1
    %v1136 = vadd.f32 %v1134, %v1135
    %v1137 = vsel %vm484, %v1103, 0.0
    %v1138 = vrot.slane %v1137, 4
    %v1139 = vadd.f32 %v1137, %v1138
    %v1140 = vrot.slane %v1139, 2
    %v1141 = vadd.f32 %v1139, %v1140
    %v1142 = vrot.slane %v1141, 1
    %v1143 = vadd.f32 %v1141, %v1142
    %v1144 = vsel %vm484, %v1104, 0.0
    %v1145 = vrot.slane %v1144, 4
    %v1146 = vadd.f32 %v1144, %v1145
    %v1147 = vrot.slane %v1146, 2
    %v1148 = vadd.f32 %v1146, %v1147
    %v1149 = vrot.slane %v1148, 1
    %v1150 = vadd.f32 %v1148, %v1149
    %v1151 = vsel %vm484, %v1105, 0.0
    %v1152 = vrot.slane %v1151, 4
    %v1153 = vadd.f32 %v1151, %v1152
    %v1154 = vrot.slane %v1153, 2
    %v1155 = vadd.f32 %v1153, %v1154
    %v1156 = vrot.slane %v1155, 1
    %v1157 = vadd.f32 %v1155, %v1156
    %v1158 = vsel %vm484, %v1106, 0.0
    %v1159 = vrot.slane %v1158, 4
    %v1160 = vadd.f32 %v1158, %v1159
    %v1161 = vrot.slane %v1160, 2
    %v1162 = vadd.f32 %v1160, %v1161
    %v1163 = vrot.slane %v1162, 1
    %v1164 = vadd.f32 %v1162, %v1163
    %v1165 = vsel %vm484, %v1107, 0.0
    %v1166 = vrot.slane %v1165, 4
    %v1167 = vadd.f32 %v1165, %v1166
    %v1168 = vrot.slane %v1167, 2
    %v1169 = vadd.f32 %v1167, %v1168
    %v1170 = vrot.slane %v1169, 1
    %v1171 = vadd.f32 %v1169, %v1170
    %v1172 = vsel %vm484, %v1108, 0.0
    %v1173 = vrot.slane %v1172, 4
    %v1174 = vadd.f32 %v1172, %v1173
    %v1175 = vrot.slane %v1174, 2
    %v1176 = vadd.f32 %v1174, %v1175
    %v1177 = vrot.slane %v1176, 1
    %v1178 = vadd.f32 %v1176, %v1177
    %v1179 = vsel %vm484, %v1109, 0.0
    %v1180 = vrot.slane %v1179, 4
    %v1181 = vadd.f32 %v1179, %v1180
    %v1182 = vrot.slane %v1181, 2
    %v1183 = vadd.f32 %v1181, %v1182
    %v1184 = vrot.slane %v1183, 1
    %v1185 = vadd.f32 %v1183, %v1184
    %v1186 = vsel %vm484, %v1110, 0.0
    %v1187 = vrot.slane %v1186, 4
    %v1188 = vadd.f32 %v1186, %v1187
    %v1189 = vrot.slane %v1188, 2
    %v1190 = vadd.f32 %v1188, %v1189
    %v1191 = vrot.slane %v1190, 1
    %v1192 = vadd.f32 %v1190, %v1191
    %v1193 = vsel %vm484, %v1111, 0.0
    %v1194 = vrot.slane %v1193, 4
    %v1195 = vadd.f32 %v1193, %v1194
    %v1196 = vrot.slane %v1195, 2
    %v1197 = vadd.f32 %v1195, %v1196
    %v1198 = vrot.slane %v1197, 1
    %v1199 = vadd.f32 %v1197, %v1198
    %v1200 = vsel %vm484, %v1112, 0.0
    %v1201 = vrot.slane %v1200, 4
    %v1202 = vadd.f32 %v1200, %v1201
    %v1203 = vrot.slane %v1202, 2
    %v1204 = vadd.f32 %v1202, %v1203
    %v1205 = vrot.slane %v1204, 1
    %v1206 = vadd.f32 %v1204, %v1205
    %v1207 = vsel %vm484, %v1113, 0.0
    %v1208 = vrot.slane %v1207, 4
    %v1209 = vadd.f32 %v1207, %v1208
    %v1210 = vrot.slane %v1209, 2
    %v1211 = vadd.f32 %v1209, %v1210
    %v1212 = vrot.slane %v1211, 1
    %v1213 = vadd.f32 %v1211, %v1212
    %v1214 = vsel %vm484, %v1114, 0.0
    %v1215 = vrot.slane %v1214, 4
    %v1216 = vadd.f32 %v1214, %v1215
    %v1217 = vrot.slane %v1216, 2
    %v1218 = vadd.f32 %v1216, %v1217
    %v1219 = vrot.slane %v1218, 1
    %v1220 = vadd.f32 %v1218, %v1219
    %v1221 = vsel %vm484, %v1115, 0.0
    %v1222 = vrot.slane %v1221, 4
    %v1223 = vadd.f32 %v1221, %v1222
    %v1224 = vrot.slane %v1223, 2
    %v1225 = vadd.f32 %v1223, %v1224
    %v1226 = vrot.slane %v1225, 1
    %v1227 = vadd.f32 %v1225, %v1226
    %v1244 = vsel %vm844, %v1129, %v1122
    %v1245 = vsel %vm846, %v1136, %v1244
    %v1246 = vsel %vm848, %v1143, %v1245
    %v1247 = vsel %vm850, %v1150, %v1246
    %v1248 = vsel %vm852, %v1157, %v1247
    %v1249 = vsel %vm854, %v1164, %v1248
    %v1250 = vsel %vm856, %v1171, %v1249
    %v1251 = vsel %vm844, %v1185, %v1178
    %v1252 = vsel %vm846, %v1192, %v1251
    %v1253 = vsel %vm848, %v1199, %v1252
    %v1254 = vsel %vm850, %v1206, %v1253
    %v1255 = vsel %vm852, %v1213, %v1254
    %v1256 = vsel %vm854, %v1220, %v1255
    %v1257 = vsel %vm856, %v1227, %v1256
    %v1260 = vadd.f32 %v867, %v1250
    %v1261 = vadd.f32 %v868, %v1257
    %s1262 = scalar_lea.vmem [#allocation8], 128
    %v1263 = vld [vmem:[%s1262] sm:$0xff]
    %v1264 = vld [vmem:[%s1262 + $0x8] sm:$0xff]
    %v1265 = vld [vmem:[%s1262 + $0x10] sm:$0xff]
    %v1266 = vld [vmem:[%s1262 + $0x18] sm:$0xff]
    %s1267 = scalar_lea.vmem [#allocation8], 160
    %v1268 = vld [vmem:[%s1267] sm:$0xff]
    %v1269 = vld [vmem:[%s1267 + $0x8] sm:$0xff]
    %v1270 = vld [vmem:[%s1267 + $0x10] sm:$0xff]
    %v1271 = vld [vmem:[%s1267 + $0x18] sm:$0xff]
    %s1272 = scalar_lea.vmem [#allocation10], 6
    %v1273 = vld [vmem:[%s1272] sm:$0x1]
    %s1274 = scalar_lea.vmem [#allocation10], 7
    %v1275 = vld [vmem:[%s1274] sm:$0x1]
    %s1276 = scalar_lea.vmem [#allocation10], 8
    %v1277 = vld [vmem:[%s1276] sm:$0x1]
    %v1279 = vsel %vm484, %v1260, 0
    %v1282 = vsel %vm484, %v1261, 0
    %1284 = vmatpush.msra.mxu0 0.0
    %1285 = vmatpush.msra.mxu0 0.0
    %1286 = vmatpush.msra.mxu0 0.0
    %1287 = vmatpush.msra.mxu0 0.0
    %1288 = vmatpush.msra.mxu0 0.0
    %1289 = vmatpush.msra.mxu0 0.0
    %1290 = vmatpush.msra.mxu0 0.0
    %1291 = vmatpush.msra.mxu0 0.0
    %1292 = vmatpush.msra.mxu0 0.0
    %1293 = vmatpush.msra.mxu0 0.0
    %1294 = vmatpush.msra.mxu0 0.0
    %1295 = vmatpush.msra.mxu0 0.0
    %1296 = vmatpush.msra.mxu0 %v1266
    %1297 = vmatpush.msra.mxu0 %v1265
    %1298 = vmatpush.msra.mxu0 %v1264
    %1299 = vmatpush.msra.mxu0 %v1263
    %1300 = vmatmul.f32.gmra.mxu0 %v1279
    %v1301 = vpop.f32.mrf.mxu0
    %v1302 = vadd.f32 0.0, %v1301
    %1303 = vmatmul.f32.gmra.mxu0 %v1282
    %v1304 = vpop.f32.mrf.mxu0
    %v1305 = vadd.f32 0.0, %v1304
    %1306 = vdwg.mxu0
    %v1308 = vperm.slane %v1273, 0
    %v1310 = vmul.f32 %v364, %v1308
    %v1311 = vmul.f32 %v371, %v1308
    %v1312 = vmul.f32 %v378, %v1308
    %v1313 = vmul.f32 %v385, %v1308
    %v1314 = vmul.f32 %v392, %v1308
    %v1315 = vmul.f32 %v399, %v1308
    %v1316 = vmul.f32 %v406, %v1308
    %v1317 = vmul.f32 %v413, %v1308
    %v1318 = vmul.f32 %v420, %v1308
    %v1319 = vmul.f32 %v427, %v1308
    %v1320 = vmul.f32 %v434, %v1308
    %v1321 = vmul.f32 %v441, %v1308
    %v1322 = vmul.f32 %v448, %v1308
    %v1323 = vmul.f32 %v455, %v1308
    %v1324 = vmul.f32 %v462, %v1308
    %v1325 = vmul.f32 %v469, %v1308
    %v1326 = vadd.f32 %v1302, %v1310
    %v1327 = vadd.f32 %v1302, %v1311
    %v1328 = vadd.f32 %v1302, %v1312
    %v1329 = vadd.f32 %v1302, %v1313
    %v1330 = vadd.f32 %v1302, %v1314
    %v1331 = vadd.f32 %v1302, %v1315
    %v1332 = vadd.f32 %v1302, %v1316
    %v1333 = vadd.f32 %v1302, %v1317
    %v1334 = vadd.f32 %v1305, %v1318
    %v1335 = vadd.f32 %v1305, %v1319
    %v1336 = vadd.f32 %v1305, %v1320
    %v1337 = vadd.f32 %v1305, %v1321
    %v1338 = vadd.f32 %v1305, %v1322
    %v1339 = vadd.f32 %v1305, %v1323
    %v1340 = vadd.f32 %v1305, %v1324
    %v1341 = vadd.f32 %v1305, %v1325
    %v1343 = vperm.slane %v1275, 0
    %v1345 = vadd.f32 %v1326, %v1343
    %v1346 = vadd.f32 %v1327, %v1343
    %v1347 = vadd.f32 %v1328, %v1343
    %v1348 = vadd.f32 %v1329, %v1343
    %v1349 = vadd.f32 %v1330, %v1343
    %v1350 = vadd.f32 %v1331, %v1343
    %v1351 = vadd.f32 %v1332, %v1343
    %v1352 = vadd.f32 %v1333, %v1343
    %v1353 = vadd.f32 %v1334, %v1343
    %v1354 = vadd.f32 %v1335, %v1343
    %v1355 = vadd.f32 %v1336, %v1343
    %v1356 = vadd.f32 %v1337, %v1343
    %v1357 = vadd.f32 %v1338, %v1343
    %v1358 = vadd.f32 %v1339, %v1343
    %v1359 = vadd.f32 %v1340, %v1343
    %v1360 = vadd.f32 %v1341, %v1343
    %v1361 = vmax.f32 %v1345, 0.0
    %v1362 = vmax.f32 %v1346, 0.0
    %v1363 = vmax.f32 %v1347, 0.0
    %v1364 = vmax.f32 %v1348, 0.0
    %v1365 = vmax.f32 %v1349, 0.0
    %v1366 = vmax.f32 %v1350, 0.0
    %v1367 = vmax.f32 %v1351, 0.0
    %v1368 = vmax.f32 %v1352, 0.0
    %v1369 = vmax.f32 %v1353, 0.0
    %v1370 = vmax.f32 %v1354, 0.0
    %v1371 = vmax.f32 %v1355, 0.0
    %v1372 = vmax.f32 %v1356, 0.0
    %v1373 = vmax.f32 %v1357, 0.0
    %v1374 = vmax.f32 %v1358, 0.0
    %v1375 = vmax.f32 %v1359, 0.0
    %v1376 = vmax.f32 %v1360, 0.0
    %v1378 = vperm.slane %v1277, 0
    %v1381 = vsel %vm484, %v1361, 0
    %v1384 = vsel %vm484, %v1362, 0
    %v1387 = vsel %vm484, %v1363, 0
    %v1390 = vsel %vm484, %v1364, 0
    %v1393 = vsel %vm484, %v1365, 0
    %v1396 = vsel %vm484, %v1366, 0
    %v1399 = vsel %vm484, %v1367, 0
    %v1402 = vsel %vm484, %v1368, 0
    %v1405 = vsel %vm484, %v1369, 0
    %v1408 = vsel %vm484, %v1370, 0
    %v1411 = vsel %vm484, %v1371, 0
    %v1414 = vsel %vm484, %v1372, 0
    %v1417 = vsel %vm484, %v1373, 0
    %v1420 = vsel %vm484, %v1374, 0
    %v1423 = vsel %vm484, %v1375, 0
    %v1426 = vsel %vm484, %v1376, 0
    %1428 = vmatpush.msra.mxu0 0.0
    %1429 = vmatpush.msra.mxu0 0.0
    %1430 = vmatpush.msra.mxu0 0.0
    %1431 = vmatpush.msra.mxu0 0.0
    %1432 = vmatpush.msra.mxu0 0.0
    %1433 = vmatpush.msra.mxu0 0.0
    %1434 = vmatpush.msra.mxu0 0.0
    %1435 = vmatpush.msra.mxu0 0.0
    %1436 = vmatpush.msra.mxu0 0.0
    %1437 = vmatpush.msra.mxu0 0.0
    %1438 = vmatpush.msra.mxu0 0.0
    %1439 = vmatpush.msra.mxu0 0.0
    %1440 = vmatpush.msra.mxu0 %v1271
    %1441 = vmatpush.msra.mxu0 %v1270
    %1442 = vmatpush.msra.mxu0 %v1269
    %1443 = vmatpush.msra.mxu0 %v1268
    %1444 = vmatmul.f32.gmra.mxu0 %v1381
    %v1445 = vpop.f32.mrf.mxu0
    %v1446 = vadd.f32 %v1378, %v1445
    %1447 = vmatmul.f32.gmra.mxu0 %v1384
    %v1448 = vpop.f32.mrf.mxu0
    %v1449 = vadd.f32 %v1378, %v1448
    %1450 = vmatmul.f32.gmra.mxu0 %v1387
    %v1451 = vpop.f32.mrf.mxu0
    %v1452 = vadd.f32 %v1378, %v1451
    %1453 = vmatmul.f32.gmra.mxu0 %v1390
    %v1454 = vpop.f32.mrf.mxu0
    %v1455 = vadd.f32 %v1378, %v1454
    %1456 = vmatmul.f32.gmra.mxu0 %v1393
    %v1457 = vpop.f32.mrf.mxu0
    %v1458 = vadd.f32 %v1378, %v1457
    %1459 = vmatmul.f32.gmra.mxu0 %v1396
    %v1460 = vpop.f32.mrf.mxu0
    %v1461 = vadd.f32 %v1378, %v1460
    %1462 = vmatmul.f32.gmra.mxu0 %v1399
    %v1463 = vpop.f32.mrf.mxu0
    %v1464 = vadd.f32 %v1378, %v1463
    %1465 = vmatmul.f32.gmra.mxu0 %v1402
    %v1466 = vpop.f32.mrf.mxu0
    %v1467 = vadd.f32 %v1378, %v1466
    %1468 = vmatmul.f32.gmra.mxu0 %v1405
    %v1469 = vpop.f32.mrf.mxu0
    %v1470 = vadd.f32 %v1378, %v1469
    %1471 = vmatmul.f32.gmra.mxu0 %v1408
    %v1472 = vpop.f32.mrf.mxu0
    %v1473 = vadd.f32 %v1378, %v1472
    %1474 = vmatmul.f32.gmra.mxu0 %v1411
    %v1475 = vpop.f32.mrf.mxu0
    %v1476 = vadd.f32 %v1378, %v1475
    %1477 = vmatmul.f32.gmra.mxu0 %v1414
    %v1478 = vpop.f32.mrf.mxu0
    %v1479 = vadd.f32 %v1378, %v1478
    %1480 = vmatmul.f32.gmra.mxu0 %v1417
    %v1481 = vpop.f32.mrf.mxu0
    %v1482 = vadd.f32 %v1378, %v1481
    %1483 = vmatmul.f32.gmra.mxu0 %v1420
    %v1484 = vpop.f32.mrf.mxu0
    %v1485 = vadd.f32 %v1378, %v1484
    %1486 = vmatmul.f32.gmra.mxu0 %v1423
    %v1487 = vpop.f32.mrf.mxu0
    %v1488 = vadd.f32 %v1378, %v1487
    %1489 = vmatmul.f32.gmra.mxu0 %v1426
    %v1490 = vpop.f32.mrf.mxu0
    %v1491 = vadd.f32 %v1378, %v1490
    %1492 = vdwg.mxu0
    %v1493 = vmul.f32 %v252, %v1446
    %v1494 = vmul.f32 %v259, %v1449
    %v1495 = vmul.f32 %v266, %v1452
    %v1496 = vmul.f32 %v273, %v1455
    %v1497 = vmul.f32 %v280, %v1458
    %v1498 = vmul.f32 %v287, %v1461
    %v1499 = vmul.f32 %v294, %v1464
    %v1500 = vmul.f32 %v301, %v1467
    %v1501 = vmul.f32 %v308, %v1470
    %v1502 = vmul.f32 %v315, %v1473
    %v1503 = vmul.f32 %v322, %v1476
    %v1504 = vmul.f32 %v329, %v1479
    %v1505 = vmul.f32 %v336, %v1482
    %v1506 = vmul.f32 %v343, %v1485
    %v1507 = vmul.f32 %v350, %v1488
    %v1508 = vmul.f32 %v357, %v1491
    %v1509 = vsel %vm484, %v1493, 0.0
    %v1510 = vrot.slane %v1509, 4
    %v1511 = vadd.f32 %v1509, %v1510
    %v1512 = vrot.slane %v1511, 2
    %v1513 = vadd.f32 %v1511, %v1512
    %v1514 = vrot.slane %v1513, 1
    %v1515 = vadd.f32 %v1513, %v1514
    %v1516 = vsel %vm484, %v1494, 0.0
    %v1517 = vrot.slane %v1516, 4
    %v1518 = vadd.f32 %v1516, %v1517
    %v1519 = vrot.slane %v1518, 2
    %v1520 = vadd.f32 %v1518, %v1519
    %v1521 = vrot.slane %v1520, 1
    %v1522 = vadd.f32 %v1520, %v1521
    %v1523 = vsel %vm484, %v1495, 0.0
    %v1524 = vrot.slane %v1523, 4
    %v1525 = vadd.f32 %v1523, %v1524
    %v1526 = vrot.slane %v1525, 2
    %v1527 = vadd.f32 %v1525, %v1526
    %v1528 = vrot.slane %v1527, 1
    %v1529 = vadd.f32 %v1527, %v1528
    %v1530 = vsel %vm484, %v1496, 0.0
    %v1531 = vrot.slane %v1530, 4
    %v1532 = vadd.f32 %v1530, %v1531
    %v1533 = vrot.slane %v1532, 2
    %v1534 = vadd.f32 %v1532, %v1533
    %v1535 = vrot.slane %v1534, 1
    %v1536 = vadd.f32 %v1534, %v1535
    %v1537 = vsel %vm484, %v1497, 0.0
    %v1538 = vrot.slane %v1537, 4
    %v1539 = vadd.f32 %v1537, %v1538
    %v1540 = vrot.slane %v1539, 2
    %v1541 = vadd.f32 %v1539, %v1540
    %v1542 = vrot.slane %v1541, 1
    %v1543 = vadd.f32 %v1541, %v1542
    %v1544 = vsel %vm484, %v1498, 0.0
    %v1545 = vrot.slane %v1544, 4
    %v1546 = vadd.f32 %v1544, %v1545
    %v1547 = vrot.slane %v1546, 2
    %v1548 = vadd.f32 %v1546, %v1547
    %v1549 = vrot.slane %v1548, 1
    %v1550 = vadd.f32 %v1548, %v1549
    %v1551 = vsel %vm484, %v1499, 0.0
    %v1552 = vrot.slane %v1551, 4
    %v1553 = vadd.f32 %v1551, %v1552
    %v1554 = vrot.slane %v1553, 2
    %v1555 = vadd.f32 %v1553, %v1554
    %v1556 = vrot.slane %v1555, 1
    %v1557 = vadd.f32 %v1555, %v1556
    %v1558 = vsel %vm484, %v1500, 0.0
    %v1559 = vrot.slane %v1558, 4
    %v1560 = vadd.f32 %v1558, %v1559
    %v1561 = vrot.slane %v1560, 2
    %v1562 = vadd.f32 %v1560, %v1561
    %v1563 = vrot.slane %v1562, 1
    %v1564 = vadd.f32 %v1562, %v1563
    %v1565 = vsel %vm484, %v1501, 0.0
    %v1566 = vrot.slane %v1565, 4
    %v1567 = vadd.f32 %v1565, %v1566
    %v1568 = vrot.slane %v1567, 2
    %v1569 = vadd.f32 %v1567, %v1568
    %v1570 = vrot.slane %v1569, 1
    %v1571 = vadd.f32 %v1569, %v1570
    %v1572 = vsel %vm484, %v1502, 0.0
    %v1573 = vrot.slane %v1572, 4
    %v1574 = vadd.f32 %v1572, %v1573
    %v1575 = vrot.slane %v1574, 2
    %v1576 = vadd.f32 %v1574, %v1575
    %v1577 = vrot.slane %v1576, 1
    %v1578 = vadd.f32 %v1576, %v1577
    %v1579 = vsel %vm484, %v1503, 0.0
    %v1580 = vrot.slane %v1579, 4
    %v1581 = vadd.f32 %v1579, %v1580
    %v1582 = vrot.slane %v1581, 2
    %v1583 = vadd.f32 %v1581, %v1582
    %v1584 = vrot.slane %v1583, 1
    %v1585 = vadd.f32 %v1583, %v1584
    %v1586 = vsel %vm484, %v1504, 0.0
    %v1587 = vrot.slane %v1586, 4
    %v1588 = vadd.f32 %v1586, %v1587
    %v1589 = vrot.slane %v1588, 2
    %v1590 = vadd.f32 %v1588, %v1589
    %v1591 = vrot.slane %v1590, 1
    %v1592 = vadd.f32 %v1590, %v1591
    %v1593 = vsel %vm484, %v1505, 0.0
    %v1594 = vrot.slane %v1593, 4
    %v1595 = vadd.f32 %v1593, %v1594
    %v1596 = vrot.slane %v1595, 2
    %v1597 = vadd.f32 %v1595, %v1596
    %v1598 = vrot.slane %v1597, 1
    %v1599 = vadd.f32 %v1597, %v1598
    %v1600 = vsel %vm484, %v1506, 0.0
    %v1601 = vrot.slane %v1600, 4
    %v1602 = vadd.f32 %v1600, %v1601
    %v1603 = vrot.slane %v1602, 2
    %v1604 = vadd.f32 %v1602, %v1603
    %v1605 = vrot.slane %v1604, 1
    %v1606 = vadd.f32 %v1604, %v1605
    %v1607 = vsel %vm484, %v1507, 0.0
    %v1608 = vrot.slane %v1607, 4
    %v1609 = vadd.f32 %v1607, %v1608
    %v1610 = vrot.slane %v1609, 2
    %v1611 = vadd.f32 %v1609, %v1610
    %v1612 = vrot.slane %v1611, 1
    %v1613 = vadd.f32 %v1611, %v1612
    %v1614 = vsel %vm484, %v1508, 0.0
    %v1615 = vrot.slane %v1614, 4
    %v1616 = vadd.f32 %v1614, %v1615
    %v1617 = vrot.slane %v1616, 2
    %v1618 = vadd.f32 %v1616, %v1617
    %v1619 = vrot.slane %v1618, 1
    %v1620 = vadd.f32 %v1618, %v1619
    %v1637 = vsel %vm844, %v1522, %v1515
    %v1638 = vsel %vm846, %v1529, %v1637
    %v1639 = vsel %vm848, %v1536, %v1638
    %v1640 = vsel %vm850, %v1543, %v1639
    %v1641 = vsel %vm852, %v1550, %v1640
    %v1642 = vsel %vm854, %v1557, %v1641
    %v1643 = vsel %vm856, %v1564, %v1642
    %v1644 = vsel %vm844, %v1578, %v1571
    %v1645 = vsel %vm846, %v1585, %v1644
    %v1646 = vsel %vm848, %v1592, %v1645
    %v1647 = vsel %vm850, %v1599, %v1646
    %v1648 = vsel %vm852, %v1606, %v1647
    %v1649 = vsel %vm854, %v1613, %v1648
    %v1650 = vsel %vm856, %v1620, %v1649
    %v1653 = vadd.f32 %v1260, %v1643
    %v1654 = vadd.f32 %v1261, %v1650
    %s1655 = scalar_lea.vmem [#allocation8], 192
    %v1656 = vld [vmem:[%s1655] sm:$0xff]
    %v1657 = vld [vmem:[%s1655 + $0x8] sm:$0xff]
    %v1658 = vld [vmem:[%s1655 + $0x10] sm:$0xff]
    %v1659 = vld [vmem:[%s1655 + $0x18] sm:$0xff]
    %s1660 = scalar_lea.vmem [#allocation8], 224
    %v1661 = vld [vmem:[%s1660] sm:$0xff]
    %v1662 = vld [vmem:[%s1660 + $0x8] sm:$0xff]
    %v1663 = vld [vmem:[%s1660 + $0x10] sm:$0xff]
    %v1664 = vld [vmem:[%s1660 + $0x18] sm:$0xff]
    %s1665 = scalar_lea.vmem [#allocation10], 9
    %v1666 = vld [vmem:[%s1665] sm:$0x1]
    %s1667 = scalar_lea.vmem [#allocation10], 10
    %v1668 = vld [vmem:[%s1667] sm:$0x1]
    %s1669 = scalar_lea.vmem [#allocation10], 11
    %v1670 = vld [vmem:[%s1669] sm:$0x1]
    %v1672 = vsel %vm484, %v1653, 0
    %v1675 = vsel %vm484, %v1654, 0
    %1677 = vmatpush.msra.mxu0 0.0
    %1678 = vmatpush.msra.mxu0 0.0
    %1679 = vmatpush.msra.mxu0 0.0
    %1680 = vmatpush.msra.mxu0 0.0
    %1681 = vmatpush.msra.mxu0 0.0
    %1682 = vmatpush.msra.mxu0 0.0
    %1683 = vmatpush.msra.mxu0 0.0
    %1684 = vmatpush.msra.mxu0 0.0
    %1685 = vmatpush.msra.mxu0 0.0
    %1686 = vmatpush.msra.mxu0 0.0
    %1687 = vmatpush.msra.mxu0 0.0
    %1688 = vmatpush.msra.mxu0 0.0
    %1689 = vmatpush.msra.mxu0 %v1659
    %1690 = vmatpush.msra.mxu0 %v1658
    %1691 = vmatpush.msra.mxu0 %v1657
    %1692 = vmatpush.msra.mxu0 %v1656
    %1693 = vmatmul.f32.gmra.mxu0 %v1672
    %v1694 = vpop.f32.mrf.mxu0
    %v1695 = vadd.f32 0.0, %v1694
    %1696 = vmatmul.f32.gmra.mxu0 %v1675
    %v1697 = vpop.f32.mrf.mxu0
    %v1698 = vadd.f32 0.0, %v1697
    %1699 = vdwg.mxu0
    %v1701 = vperm.slane %v1666, 0
    %v1703 = vmul.f32 %v364, %v1701
    %v1704 = vmul.f32 %v371, %v1701
    %v1705 = vmul.f32 %v378, %v1701
    %v1706 = vmul.f32 %v385, %v1701
    %v1707 = vmul.f32 %v392, %v1701
    %v1708 = vmul.f32 %v399, %v1701
    %v1709 = vmul.f32 %v406, %v1701
    %v1710 = vmul.f32 %v413, %v1701
    %v1711 = vmul.f32 %v420, %v1701
    %v1712 = vmul.f32 %v427, %v1701
    %v1713 = vmul.f32 %v434, %v1701
    %v1714 = vmul.f32 %v441, %v1701
    %v1715 = vmul.f32 %v448, %v1701
    %v1716 = vmul.f32 %v455, %v1701
    %v1717 = vmul.f32 %v462, %v1701
    %v1718 = vmul.f32 %v469, %v1701
    %v1719 = vadd.f32 %v1695, %v1703
    %v1720 = vadd.f32 %v1695, %v1704
    %v1721 = vadd.f32 %v1695, %v1705
    %v1722 = vadd.f32 %v1695, %v1706
    %v1723 = vadd.f32 %v1695, %v1707
    %v1724 = vadd.f32 %v1695, %v1708
    %v1725 = vadd.f32 %v1695, %v1709
    %v1726 = vadd.f32 %v1695, %v1710
    %v1727 = vadd.f32 %v1698, %v1711
    %v1728 = vadd.f32 %v1698, %v1712
    %v1729 = vadd.f32 %v1698, %v1713
    %v1730 = vadd.f32 %v1698, %v1714
    %v1731 = vadd.f32 %v1698, %v1715
    %v1732 = vadd.f32 %v1698, %v1716
    %v1733 = vadd.f32 %v1698, %v1717
    %v1734 = vadd.f32 %v1698, %v1718
    %v1736 = vperm.slane %v1668, 0
    %v1738 = vadd.f32 %v1719, %v1736
    %v1739 = vadd.f32 %v1720, %v1736
    %v1740 = vadd.f32 %v1721, %v1736
    %v1741 = vadd.f32 %v1722, %v1736
    %v1742 = vadd.f32 %v1723, %v1736
    %v1743 = vadd.f32 %v1724, %v1736
    %v1744 = vadd.f32 %v1725, %v1736
    %v1745 = vadd.f32 %v1726, %v1736
    %v1746 = vadd.f32 %v1727, %v1736
    %v1747 = vadd.f32 %v1728, %v1736
    %v1748 = vadd.f32 %v1729, %v1736
    %v1749 = vadd.f32 %v1730, %v1736
    %v1750 = vadd.f32 %v1731, %v1736
    %v1751 = vadd.f32 %v1732, %v1736
    %v1752 = vadd.f32 %v1733, %v1736
    %v1753 = vadd.f32 %v1734, %v1736
    %v1754 = vmax.f32 %v1738, 0.0
    %v1755 = vmax.f32 %v1739, 0.0
    %v1756 = vmax.f32 %v1740, 0.0
    %v1757 = vmax.f32 %v1741, 0.0
    %v1758 = vmax.f32 %v1742, 0.0
    %v1759 = vmax.f32 %v1743, 0.0
    %v1760 = vmax.f32 %v1744, 0.0
    %v1761 = vmax.f32 %v1745, 0.0
    %v1762 = vmax.f32 %v1746, 0.0
    %v1763 = vmax.f32 %v1747, 0.0
    %v1764 = vmax.f32 %v1748, 0.0
    %v1765 = vmax.f32 %v1749, 0.0
    %v1766 = vmax.f32 %v1750, 0.0
    %v1767 = vmax.f32 %v1751, 0.0
    %v1768 = vmax.f32 %v1752, 0.0
    %v1769 = vmax.f32 %v1753, 0.0
    %v1771 = vperm.slane %v1670, 0
    %v1774 = vsel %vm484, %v1754, 0
    %v1777 = vsel %vm484, %v1755, 0
    %v1780 = vsel %vm484, %v1756, 0
    %v1783 = vsel %vm484, %v1757, 0
    %v1786 = vsel %vm484, %v1758, 0
    %v1789 = vsel %vm484, %v1759, 0
    %v1792 = vsel %vm484, %v1760, 0
    %v1795 = vsel %vm484, %v1761, 0
    %v1798 = vsel %vm484, %v1762, 0
    %v1801 = vsel %vm484, %v1763, 0
    %v1804 = vsel %vm484, %v1764, 0
    %v1807 = vsel %vm484, %v1765, 0
    %v1810 = vsel %vm484, %v1766, 0
    %v1813 = vsel %vm484, %v1767, 0
    %v1816 = vsel %vm484, %v1768, 0
    %v1819 = vsel %vm484, %v1769, 0
    %1821 = vmatpush.msra.mxu0 0.0
    %1822 = vmatpush.msra.mxu0 0.0
    %1823 = vmatpush.msra.mxu0 0.0
    %1824 = vmatpush.msra.mxu0 0.0
    %1825 = vmatpush.msra.mxu0 0.0
    %1826 = vmatpush.msra.mxu0 0.0
    %1827 = vmatpush.msra.mxu0 0.0
    %1828 = vmatpush.msra.mxu0 0.0
    %1829 = vmatpush.msra.mxu0 0.0
    %1830 = vmatpush.msra.mxu0 0.0
    %1831 = vmatpush.msra.mxu0 0.0
    %1832 = vmatpush.msra.mxu0 0.0
    %1833 = vmatpush.msra.mxu0 %v1664
    %1834 = vmatpush.msra.mxu0 %v1663
    %1835 = vmatpush.msra.mxu0 %v1662
    %1836 = vmatpush.msra.mxu0 %v1661
    %1837 = vmatmul.f32.gmra.mxu0 %v1774
    %v1838 = vpop.f32.mrf.mxu0
    %v1839 = vadd.f32 %v1771, %v1838
    %1840 = vmatmul.f32.gmra.mxu0 %v1777
    %v1841 = vpop.f32.mrf.mxu0
    %v1842 = vadd.f32 %v1771, %v1841
    %1843 = vmatmul.f32.gmra.mxu0 %v1780
    %v1844 = vpop.f32.mrf.mxu0
    %v1845 = vadd.f32 %v1771, %v1844
    %1846 = vmatmul.f32.gmra.mxu0 %v1783
    %v1847 = vpop.f32.mrf.mxu0
    %v1848 = vadd.f32 %v1771, %v1847
    %1849 = vmatmul.f32.gmra.mxu0 %v1786
    %v1850 = vpop.f32.mrf.mxu0
    %v1851 = vadd.f32 %v1771, %v1850
    %1852 = vmatmul.f32.gmra.mxu0 %v1789
    %v1853 = vpop.f32.mrf.mxu0
    %v1854 = vadd.f32 %v1771, %v1853
    %1855 = vmatmul.f32.gmra.mxu0 %v1792
    %v1856 = vpop.f32.mrf.mxu0
    %v1857 = vadd.f32 %v1771, %v1856
    %1858 = vmatmul.f32.gmra.mxu0 %v1795
    %v1859 = vpop.f32.mrf.mxu0
    %v1860 = vadd.f32 %v1771, %v1859
    %1861 = vmatmul.f32.gmra.mxu0 %v1798
    %v1862 = vpop.f32.mrf.mxu0
    %v1863 = vadd.f32 %v1771, %v1862
    %1864 = vmatmul.f32.gmra.mxu0 %v1801
    %v1865 = vpop.f32.mrf.mxu0
    %v1866 = vadd.f32 %v1771, %v1865
    %1867 = vmatmul.f32.gmra.mxu0 %v1804
    %v1868 = vpop.f32.mrf.mxu0
    %v1869 = vadd.f32 %v1771, %v1868
    %1870 = vmatmul.f32.gmra.mxu0 %v1807
    %v1871 = vpop.f32.mrf.mxu0
    %v1872 = vadd.f32 %v1771, %v1871
    %1873 = vmatmul.f32.gmra.mxu0 %v1810
    %v1874 = vpop.f32.mrf.mxu0
    %v1875 = vadd.f32 %v1771, %v1874
    %1876 = vmatmul.f32.gmra.mxu0 %v1813
    %v1877 = vpop.f32.mrf.mxu0
    %v1878 = vadd.f32 %v1771, %v1877
    %1879 = vmatmul.f32.gmra.mxu0 %v1816
    %v1880 = vpop.f32.mrf.mxu0
    %v1881 = vadd.f32 %v1771, %v1880
    %1882 = vmatmul.f32.gmra.mxu0 %v1819
    %v1883 = vpop.f32.mrf.mxu0
    %v1884 = vadd.f32 %v1771, %v1883
    %1885 = vdwg.mxu0
    %v1886 = vmul.f32 %v252, %v1839
    %v1887 = vmul.f32 %v259, %v1842
    %v1888 = vmul.f32 %v266, %v1845
    %v1889 = vmul.f32 %v273, %v1848
    %v1890 = vmul.f32 %v280, %v1851
    %v1891 = vmul.f32 %v287, %v1854
    %v1892 = vmul.f32 %v294, %v1857
    %v1893 = vmul.f32 %v301, %v1860
    %v1894 = vmul.f32 %v308, %v1863
    %v1895 = vmul.f32 %v315, %v1866
    %v1896 = vmul.f32 %v322, %v1869
    %v1897 = vmul.f32 %v329, %v1872
    %v1898 = vmul.f32 %v336, %v1875
    %v1899 = vmul.f32 %v343, %v1878
    %v1900 = vmul.f32 %v350, %v1881
    %v1901 = vmul.f32 %v357, %v1884
    %v1902 = vsel %vm484, %v1886, 0.0
    %v1903 = vrot.slane %v1902, 4
    %v1904 = vadd.f32 %v1902, %v1903
    %v1905 = vrot.slane %v1904, 2
    %v1906 = vadd.f32 %v1904, %v1905
    %v1907 = vrot.slane %v1906, 1
    %v1908 = vadd.f32 %v1906, %v1907
    %v1909 = vsel %vm484, %v1887, 0.0
    %v1910 = vrot.slane %v1909, 4
    %v1911 = vadd.f32 %v1909, %v1910
    %v1912 = vrot.slane %v1911, 2
    %v1913 = vadd.f32 %v1911, %v1912
    %v1914 = vrot.slane %v1913, 1
    %v1915 = vadd.f32 %v1913, %v1914
    %v1916 = vsel %vm484, %v1888, 0.0
    %v1917 = vrot.slane %v1916, 4
    %v1918 = vadd.f32 %v1916, %v1917
    %v1919 = vrot.slane %v1918, 2
    %v1920 = vadd.f32 %v1918, %v1919
    %v1921 = vrot.slane %v1920, 1
    %v1922 = vadd.f32 %v1920, %v1921
    %v1923 = vsel %vm484, %v1889, 0.0
    %v1924 = vrot.slane %v1923, 4
    %v1925 = vadd.f32 %v1923, %v1924
    %v1926 = vrot.slane %v1925, 2
    %v1927 = vadd.f32 %v1925, %v1926
    %v1928 = vrot.slane %v1927, 1
    %v1929 = vadd.f32 %v1927, %v1928
    %v1930 = vsel %vm484, %v1890, 0.0
    %v1931 = vrot.slane %v1930, 4
    %v1932 = vadd.f32 %v1930, %v1931
    %v1933 = vrot.slane %v1932, 2
    %v1934 = vadd.f32 %v1932, %v1933
    %v1935 = vrot.slane %v1934, 1
    %v1936 = vadd.f32 %v1934, %v1935
    %v1937 = vsel %vm484, %v1891, 0.0
    %v1938 = vrot.slane %v1937, 4
    %v1939 = vadd.f32 %v1937, %v1938
    %v1940 = vrot.slane %v1939, 2
    %v1941 = vadd.f32 %v1939, %v1940
    %v1942 = vrot.slane %v1941, 1
    %v1943 = vadd.f32 %v1941, %v1942
    %v1944 = vsel %vm484, %v1892, 0.0
    %v1945 = vrot.slane %v1944, 4
    %v1946 = vadd.f32 %v1944, %v1945
    %v1947 = vrot.slane %v1946, 2
    %v1948 = vadd.f32 %v1946, %v1947
    %v1949 = vrot.slane %v1948, 1
    %v1950 = vadd.f32 %v1948, %v1949
    %v1951 = vsel %vm484, %v1893, 0.0
    %v1952 = vrot.slane %v1951, 4
    %v1953 = vadd.f32 %v1951, %v1952
    %v1954 = vrot.slane %v1953, 2
    %v1955 = vadd.f32 %v1953, %v1954
    %v1956 = vrot.slane %v1955, 1
    %v1957 = vadd.f32 %v1955, %v1956
    %v1958 = vsel %vm484, %v1894, 0.0
    %v1959 = vrot.slane %v1958, 4
    %v1960 = vadd.f32 %v1958, %v1959
    %v1961 = vrot.slane %v1960, 2
    %v1962 = vadd.f32 %v1960, %v1961
    %v1963 = vrot.slane %v1962, 1
    %v1964 = vadd.f32 %v1962, %v1963
    %v1965 = vsel %vm484, %v1895, 0.0
    %v1966 = vrot.slane %v1965, 4
    %v1967 = vadd.f32 %v1965, %v1966
    %v1968 = vrot.slane %v1967, 2
    %v1969 = vadd.f32 %v1967, %v1968
    %v1970 = vrot.slane %v1969, 1
    %v1971 = vadd.f32 %v1969, %v1970
    %v1972 = vsel %vm484, %v1896, 0.0
    %v1973 = vrot.slane %v1972, 4
    %v1974 = vadd.f32 %v1972, %v1973
    %v1975 = vrot.slane %v1974, 2
    %v1976 = vadd.f32 %v1974, %v1975
    %v1977 = vrot.slane %v1976, 1
    %v1978 = vadd.f32 %v1976, %v1977
    %v1979 = vsel %vm484, %v1897, 0.0
    %v1980 = vrot.slane %v1979, 4
    %v1981 = vadd.f32 %v1979, %v1980
    %v1982 = vrot.slane %v1981, 2
    %v1983 = vadd.f32 %v1981, %v1982
    %v1984 = vrot.slane %v1983, 1
    %v1985 = vadd.f32 %v1983, %v1984
    %v1986 = vsel %vm484, %v1898, 0.0
    %v1987 = vrot.slane %v1986, 4
    %v1988 = vadd.f32 %v1986, %v1987
    %v1989 = vrot.slane %v1988, 2
    %v1990 = vadd.f32 %v1988, %v1989
    %v1991 = vrot.slane %v1990, 1
    %v1992 = vadd.f32 %v1990, %v1991
    %v1993 = vsel %vm484, %v1899, 0.0
    %v1994 = vrot.slane %v1993, 4
    %v1995 = vadd.f32 %v1993, %v1994
    %v1996 = vrot.slane %v1995, 2
    %v1997 = vadd.f32 %v1995, %v1996
    %v1998 = vrot.slane %v1997, 1
    %v1999 = vadd.f32 %v1997, %v1998
    %v2000 = vsel %vm484, %v1900, 0.0
    %v2001 = vrot.slane %v2000, 4
    %v2002 = vadd.f32 %v2000, %v2001
    %v2003 = vrot.slane %v2002, 2
    %v2004 = vadd.f32 %v2002, %v2003
    %v2005 = vrot.slane %v2004, 1
    %v2006 = vadd.f32 %v2004, %v2005
    %v2007 = vsel %vm484, %v1901, 0.0
    %v2008 = vrot.slane %v2007, 4
    %v2009 = vadd.f32 %v2007, %v2008
    %v2010 = vrot.slane %v2009, 2
    %v2011 = vadd.f32 %v2009, %v2010
    %v2012 = vrot.slane %v2011, 1
    %v2013 = vadd.f32 %v2011, %v2012
    %v2030 = vsel %vm844, %v1915, %v1908
    %v2031 = vsel %vm846, %v1922, %v2030
    %v2032 = vsel %vm848, %v1929, %v2031
    %v2033 = vsel %vm850, %v1936, %v2032
    %v2034 = vsel %vm852, %v1943, %v2033
    %v2035 = vsel %vm854, %v1950, %v2034
    %v2036 = vsel %vm856, %v1957, %v2035
    %v2037 = vsel %vm844, %v1971, %v1964
    %v2038 = vsel %vm846, %v1978, %v2037
    %v2039 = vsel %vm848, %v1985, %v2038
    %v2040 = vsel %vm850, %v1992, %v2039
    %v2041 = vsel %vm852, %v1999, %v2040
    %v2042 = vsel %vm854, %v2006, %v2041
    %v2043 = vsel %vm856, %v2013, %v2042
    %v2046 = vadd.f32 %v1653, %v2036
    %v2047 = vadd.f32 %v1654, %v2043
    %v2048 = vmul.f32 %v2046, %v220
    %v2049 = vmul.f32 %v2047, %v227
    %2050 = vst.msk [vmem:[#allocation11] sm:$0xff] %vm484, %v2048
    %2051 = vst.msk [vmem:[#allocation11 + $0x8] sm:$0xff] %vm484, %v2049
    // Predicated region
    $region42: #{tpu_custom_call.1} parent=1 // pred_check
      _
    $region43: #{tpu_custom_call.1} parent=1 // pred_check_branch
      %2053 = sbr.rel (0) target = $region45
    $region44: #{tpu_custom_call.1} parent=1 // pred_region
      %2055 = vsyncadd [#allocation4], 0
      %s2056 = sshll.u32 [#allocation11], 4
      %s2057 = int_to_ptr.vmem [resolvable:$true] %s2056
      %s2058 = sshll.u32 %s5, 4
      %s2059 = int_to_ptr.hbm [resolvable:$true] %s2058
      %2064 = dma.vmem_to_hbm [thread:$0]  %s2057, 256, %s2059, [#allocation4], 128, 128, 8
    $region45: #{tpu_custom_call.1} parent=1 // pred_fallthru
      _
    // Predicated region
    $region46: #{tpu_custom_call.1} parent=1 // pred_check
      _
    $region47: #{tpu_custom_call.1} parent=1 // pred_check_branch
      %2066 = sbr.rel (0) target = $region49
    $region48: #{tpu_custom_call.1} parent=1 // pred_region
      %2068 = dma.done [#allocation4], 256
    $region49: #{tpu_custom_call.1} parent=1 // pred_fallthru
      _
    %2069 = vsyncpa [#allocation3], 1
    %2070 = vsyncpa [#allocation6], 1
    %2071 = vsyncpa [#allocation9], 1
    %2072 = vsyncpa [#allocation4], 1

</llo_original>
